<compile_context>
chip_gen: v5e
topology: v5e:2x2
jax: 0.10.0
libtpu: 0.0.40
codegen_flags: <defaults>
</compile_context>

<pallas_src>
import functools

import jax
import jax.numpy as jnp
from jax import lax
from jax.experimental import pallas as pl
from jax.experimental.pallas import tpu as pltpu

EPS = 1e-5
LANES = 128


def _rup(x, m):
    return (x + m - 1) // m * m


# ----------------------------------------------------------------------------- kernels --

def _conv3x3_accumulate(act, pad_ref, w_ref, acc_ref, Hp, Wp, Cin_p):
    """3x3 'SAME' conv: write `act` (Hp, Wp, Cin_p) into the zero-padded scratch, then
    accumulate nine shifted lane-dense matmuls into the persistent f32 accumulator.
    Conv bias is intentionally omitted: it cancels under training-mode BatchNorm."""
    cdt = pad_ref.dtype
    rows = Hp * Wp

    # Border-only zeroing (interior written exactly once); every store is 128-lane dense.
    pad_ref[0:1, :, :] = jnp.zeros((1, Wp + 2, Cin_p), cdt)
    pad_ref[Hp + 1:Hp + 2, :, :] = jnp.zeros((1, Wp + 2, Cin_p), cdt)
    pad_ref[:, 0:1, :] = jnp.zeros((Hp + 2, 1, Cin_p), cdt)
    pad_ref[:, Wp + 1:Wp + 2, :] = jnp.zeros((Hp + 2, 1, Cin_p), cdt)
    pad_ref[1:Hp + 1, 1:Wp + 1, :] = act.astype(cdt)   # cast to MXU dtype only here

    acc_ref[...] = jnp.zeros_like(acc_ref)
    for ky in range(3):
        for kx in range(3):
            k = ky * 3 + kx
            lhs = pad_ref[ky:ky + Hp, kx:kx + Wp, :].reshape(rows, Cin_p)
            acc_ref[...] += jnp.dot(lhs, w_ref[k * Cin_p:(k + 1) * Cin_p, :],
                                    preferred_element_type=jnp.float32)
    return acc_ref[...]


def _write_stats(acc, st_ref):
    """Per-band partial BatchNorm statistics: [sum; sum-of-squares] per channel."""
    st_ref[0, 0:1, :] = jnp.sum(acc, axis=0, keepdims=True)
    st_ref[0, 1:2, :] = jnp.sum(acc * acc, axis=0, keepdims=True)


def _pool_conv1_kernel(x_ref, w_ref, y_ref, st_ref, pad_ref, acc_ref,
                       *, Hp, Wp, Cin_p, Cout_p):
    del Cout_p
    # --- MaxPool2d(2) in f32 on the VPU; the input crosses HBM exactly once, un-recast.
    xr = x_ref[...]                                             # (Hp, 2, Wp, 2*Cin_p) f32
    vmax = jnp.maximum(xr[:, 0], xr[:, 1])                      # (Hp, Wp, 2*Cin_p)
    pooled = jnp.maximum(vmax[..., :Cin_p], vmax[..., Cin_p:])  # (Hp, Wp, Cin_p)

    # --- conv1 via nine shifted matmuls, f32 accumulation.
    acc = _conv3x3_accumulate(pooled, pad_ref, w_ref, acc_ref, Hp, Wp, Cin_p)
    y_ref[0] = acc                                              # pre-BN conv1 output (f32)
    _write_stats(acc, st_ref)


def _bn_relu_conv2_kernel(y1_ref, ss_ref, w_ref, y_ref, st_ref, pad_ref, acc_ref,
                          *, Hp, Wp, Cin_p, Cout_p):
    del Cout_p
    # --- fused BN1 (precomputed scale/shift) + ReLU in f32.
    y1 = jnp.maximum(y1_ref[0] * ss_ref[0:1, :] + ss_ref[1:2, :], 0.0)   # (rows, Cin_p)
    # --- conv2 via nine shifted matmuls; single lane-dense hand-off into the pad scratch.
    acc = _conv3x3_accumulate(y1.reshape(Hp, Wp, Cin_p), pad_ref, w_ref, acc_ref,
                              Hp, Wp, Cin_p)
    y_ref[0] = acc                                              # pre-BN conv2 output (f32)
    _write_stats(acc, st_ref)


def _bn_relu_kernel(y_ref, ss_ref, o_ref):
    # --- fused BN2 (precomputed scale/shift) + ReLU; lane-dense writeback.
    o_ref[0] = jnp.maximum(y_ref[0] * ss_ref[0:1, :] + ss_ref[1:2, :], 0.0)


# ----------------------------------------------------------------------------- wrapper --

def _bn_scale_shift(stats, gamma_p, beta_p, count):
    """Finalize training-mode BN from per-band partial sums (tiny: 2*C_pad floats)."""
    s1 = jnp.sum(stats[:, 0, :], axis=0)
    s2 = jnp.sum(stats[:, 1, :], axis=0)
    mean = s1 / count
    var = jnp.maximum(s2 / count - mean * mean, 0.0)   # clamp: single-pass var can round < 0
    scale = gamma_p * lax.rsqrt(var + EPS)
    shift = beta_p - mean * scale
    return jnp.stack([scale, shift], axis=0)           # (2, C_pad) f32


def down_block_forward(x_nchw, params, compute_dtype=jnp.float32):
    """Pallas implementation of _DownBlock.forward. Input/output are NCHW (PyTorch layout).

    compute_dtype only selects the MXU operand dtype (conv scratch + weights); max-pool,
    BN statistics/apply and all matmul accumulation stay in f32 (safe on v5e)."""
    w1, b1, g1, be1, w2, b2, g2, be2 = params
    del b1, b2  # conv biases cancel exactly against training-mode BN mean subtraction

    x = jnp.transpose(x_nchw, (0, 2, 3, 1)).astype(jnp.float32)      # NCHW -> NHWC
    N, H, W, Cin = x.shape
    Hp, Wp = H // 2, W // 2
    Cout = w1.shape[-1]
    rows = Hp * Wp

    Cin_p = _rup(Cin, LANES)     # lane-dense channel padding (no-op for 128-multiples)
    Cout_p = _rup(Cout, LANES)

    # Lane-pad channels once, then a free row-major reshape exposing the 2x2 pool window.
    x_p = jnp.pad(x, ((0, 0), (0, 0), (0, 0), (0, Cin_p - Cin)))
    x_r = x_p.reshape(N * Hp, 2, Wp, 2 * Cin_p)

    # Zero-lane-padded weights, flat (9*Cin_p, Cout_p); tap k occupies rows [k*Cin_p, ...).
    w1_p = (jnp.zeros((3, 3, Cin_p, Cout_p), compute_dtype)
            .at[:, :, :Cin, :Cout].set(w1.astype(compute_dtype))
            .reshape(9 * Cin_p, Cout_p))
    w2_p = (jnp.zeros((3, 3, Cout_p, Cout_p), compute_dtype)
            .at[:, :, :Cout, :Cout].set(w2.astype(compute_dtype))
            .reshape(9 * Cout_p, Cout_p))
    g1_p = jnp.zeros((Cout_p,), jnp.float32).at[:Cout].set(g1.reshape(-1))
    be1_p = jnp.zeros((Cout_p,), jnp.float32).at[:Cout].set(be1.reshape(-1))
    g2_p = jnp.zeros((Cout_p,), jnp.float32).at[:Cout].set(g2.reshape(-1))
    be2_p = jnp.zeros((Cout_p,), jnp.float32).at[:Cout].set(be2.reshape(-1))

    cparams = pltpu.CompilerParams(
        dimension_semantics=("parallel",),        # image bands -> both TensorCores on v7x
        vmem_limit_bytes=48 * 1024 * 1024,        # explicit budget, < v7x's 64 MiB physical
    )
    act_spec = pl.BlockSpec((1, rows, Cout_p), lambda n: (n, 0, 0))
    st_spec = pl.BlockSpec((1, 2, Cout_p), lambda n: (n, 0, 0))
    ss_spec = pl.BlockSpec((2, Cout_p), lambda n: (0, 0))

    # ---- Pass 1: MaxPool2d(2) + conv1 (pre-BN) + per-band BN1 partial stats -------------
    y1_pre, st1 = pl.pallas_call(
        functools.partial(_pool_conv1_kernel, Hp=Hp, Wp=Wp, Cin_p=Cin_p, Cout_p=Cout_p),
        out_shape=(jax.ShapeDtypeStruct((N, rows, Cout_p), jnp.float32),
                   jax.ShapeDtypeStruct((N, 2, Cout_p), jnp.float32)),
        grid_spec=pltpu.PrefetchScalarGridSpec(
            num_scalar_prefetch=0, grid=(N,),
            in_specs=[pl.BlockSpec((Hp, 2, Wp, 2 * Cin_p), lambda n: (n, 0, 0, 0)),
                      pl.BlockSpec((9 * Cin_p, Cout_p), lambda n: (0, 0))],
            out_specs=[act_spec, st_spec],
            scratch_shapes=[pltpu.VMEM((Hp + 2, Wp + 2, Cin_p), compute_dtype),
                            pltpu.VMEM((rows, Cout_p), jnp.float32)]),
        compiler_params=cparams,
    )(x_r, w1_p)

    ss1 = _bn_scale_shift(st1, g1_p, be1_p, N * rows)

    # ---- Pass 2: BN1 apply + ReLU + conv2 (pre-BN) + per-band BN2 partial stats ---------
    y2_pre, st2 = pl.pallas_call(
        functools.partial(_bn_relu_conv2_kernel, Hp=Hp, Wp=Wp, Cin_p=Cout_p, Cout_p=Cout_p),
        out_shape=(jax.ShapeDtypeStruct((N, rows, Cout_p), jnp.float32),
                   jax.ShapeDtypeStruct((N, 2, Cout_p), jnp.float32)),
        grid_spec=pltpu.PrefetchScalarGridSpec(
            num_scalar_prefetch=0, grid=(N,),
            in_specs=[act_spec, ss_spec,
                      pl.BlockSpec((9 * Cout_p, Cout_p), lambda n: (0, 0))],
            out_specs=[act_spec, st_spec],
            scratch_shapes=[pltpu.VMEM((Hp + 2, Wp + 2, Cout_p), compute_dtype),
                            pltpu.VMEM((rows, Cout_p), jnp.float32)]),
        compiler_params=cparams,
    )(y1_pre, ss1, w2_p)

    ss2 = _bn_scale_shift(st2, g2_p, be2_p, N * rows)

    # ---- Pass 3: BN2 apply + ReLU (needs global stats, hence a third tiny pass) ---------
    out_flat = pl.pallas_call(
        _bn_relu_kernel,
        out_shape=jax.ShapeDtypeStruct((N, rows, Cout_p), jnp.float32),
        grid_spec=pltpu.PrefetchScalarGridSpec(
            num_scalar_prefetch=0, grid=(N,),
            in_specs=[act_spec, ss_spec],
            out_specs=act_spec),
        compiler_params=cparams,
    )(y2_pre, ss2)

    out_nhwc = out_flat.reshape(N, Hp, Wp, Cout_p)[..., :Cout]     # free reshape + slice
    return jnp.transpose(out_nhwc, (0, 3, 1, 2))                   # -> NCHW


# ---------------------------------------------------------------------- params / check --

def init_params(key, Cin, Cout):
    """Deterministic synthetic parameters (shapes from the module __init__)."""
    k1, k2, k3, k4 = jax.random.split(key, 4)
    w1 = jax.random.normal(k1, (3, 3, Cin, Cout), jnp.float32) * 0.1   # HWIO
    b1 = jax.random.normal(k2, (1, Cout), jnp.float32) * 0.1
    w2 = jax.random.normal(k3, (3, 3, Cout, Cout), jnp.float32) * 0.1
    b2 = jax.random.normal(k4, (1, Cout), jnp.float32) * 0.1
    g1 = jnp.ones((1, Cout), jnp.float32)                              # BN weight init = 1
    be1 = jnp.zeros((1, Cout), jnp.float32)                            # BN bias init = 0
    g2 = jnp.ones((1, Cout), jnp.float32)
    be2 = jnp.zeros((1, Cout), jnp.float32)
    return (w1, b1, g1, be1, w2, b2, g2, be2)


def reference_forward(x_nchw, params):
    """Pure-JAX f32 reference (mirrors the PyTorch forward, including the conv biases)."""
    w1, b1, g1, be1, w2, b2, g2, be2 = params
    x = jnp.transpose(x_nchw, (0, 2, 3, 1)).astype(jnp.float32)
    N, H, W, C = x.shape
    xp = x.reshape(N, H // 2, 2, W // 2, 2, C).max(axis=(2, 4))     # MaxPool2d(2)

    def conv_bn_relu(y, w, b, g, be):
        y = lax.conv_general_dilated(
            y, w, window_strides=(1, 1), padding='SAME',
            dimension_numbers=('NHWC', 'HWIO', 'NHWC')) + b.reshape(1, 1, 1, -1)
        mean = y.mean(axis=(0, 1, 2), keepdims=True)
        var = ((y - mean) ** 2).mean(axis=(0, 1, 2), keepdims=True)
        y = (y - mean) / jnp.sqrt(var + EPS) * g.reshape(1, 1, 1, -1) + be.reshape(1, 1, 1, -1)
        return jnp.maximum(y, 0.0)

    y = conv_bn_relu(xp, w1, b1, g1, be1)
    y = conv_bn_relu(y, w2, b2, g2, be2)
    return jnp.transpose(y, (0, 3, 1, 2))


if __name__ == "__main__":
    key = jax.random.PRNGKey(0)
    kx, kp = jax.random.split(key)

    N, Cin, H, W = 2, 4, 16, 16
    Cout = 8

    x = jax.random.normal(kx, (N, Cin, H, W), jnp.float32)          # NCHW, like PyTorch
    params = init_params(kp, Cin, Cout)

    ref = reference_forward(x, params)

    # Full-precision path (parity with the f32 PyTorch module, incl. bias cancellation).
    out = jax.block_until_ready(down_block_forward(x, params))
    assert out.shape == (N, Cout, H // 2, W // 2), out.shape
    max_err = float(jnp.max(jnp.abs(out - ref)))
    assert max_err < 5e-4, f"f32 mismatch vs reference: {max_err}"

    # Mixed-precision path (bf16 MXU operands only, f32 everything else): sanity check.
    out_bf16 = jax.block_until_ready(
        down_block_forward(x, params, compute_dtype=jnp.bfloat16))
    max_err_bf16 = float(jnp.max(jnp.abs(out_bf16 - ref)))
    assert max_err_bf16 < 0.25, f"bf16 sanity mismatch vs reference: {max_err_bf16}"

    print("KERNEL_OK")
</pallas_src>

<mosaic_0001>
module attributes {stable_mosaic.version = 11 : i64} {
  func.func @_pool_conv1_kernel(%arg0: i32, %arg1: memref<8x2x8x256xf32, #tpu.memory_space<vmem>>, %arg2: memref<1152x128xf32, #tpu.memory_space<vmem>>, %arg3: memref<1x64x128xf32, #tpu.memory_space<vmem>>, %arg4: memref<1x2x128xf32, #tpu.memory_space<vmem>>, %arg5: memref<10x10x128xf32, #tpu.memory_space<vmem>>, %arg6: memref<64x128xf32, #tpu.memory_space<vmem>>) attributes {dimension_semantics = [#tpu.dimension_semantics<parallel>], iteration_bounds = array<i64: 2>, scalar_prefetch = 0 : i64, scratch_operands = 2 : i64, tpu.core_type = #tpu.core_type<tc>, window_params = [{transform_indices = @transform_0, window_bounds = array<i64: 8, 2, 8, 256>}, {pipeline_mode = #tpu.pipeline_mode<synchronous>, transform_indices = @transform_1, window_bounds = array<i64: 1152, 128>}, {transform_indices = @transform_2, window_bounds = array<i64: 1, 64, 128>}, {transform_indices = @transform_3, window_bounds = array<i64: 1, 2, 128>}]} {
    %c0 = arith.constant 0 : index
    %c0_0 = arith.constant 0 : index
    %c0_1 = arith.constant 0 : index
    %c0_2 = arith.constant 0 : index
    %0 = vector.load %arg1[%c0, %c0_0, %c0_1, %c0_2] : memref<8x2x8x256xf32, #tpu.memory_space<vmem>>, vector<8x2x8x256xf32>
    %1 = vector.extract_strided_slice %0 {offsets = [0, 0, 0, 0], sizes = [8, 1, 8, 256], strides = [1, 1, 1, 1]} : vector<8x2x8x256xf32> to vector<8x1x8x256xf32>
    %2 = vector.shape_cast %1 : vector<8x1x8x256xf32> to vector<8x8x256xf32>
    %3 = vector.extract_strided_slice %0 {offsets = [0, 1, 0, 0], sizes = [8, 1, 8, 256], strides = [1, 1, 1, 1]} : vector<8x2x8x256xf32> to vector<8x1x8x256xf32>
    %4 = vector.shape_cast %3 : vector<8x1x8x256xf32> to vector<8x8x256xf32>
    %5 = arith.maximumf %2, %4 : vector<8x8x256xf32>
    %6 = vector.extract_strided_slice %5 {offsets = [0, 0, 0], sizes = [8, 8, 128], strides = [1, 1, 1]} : vector<8x8x256xf32> to vector<8x8x128xf32>
    %7 = vector.extract_strided_slice %5 {offsets = [0, 0, 128], sizes = [8, 8, 128], strides = [1, 1, 1]} : vector<8x8x256xf32> to vector<8x8x128xf32>
    %8 = arith.maximumf %6, %7 : vector<8x8x128xf32>
    %cst = arith.constant 0.000000e+00 : f32
    %9 = vector.broadcast %cst : f32 to vector<1x10x128xf32>
    %c0_3 = arith.constant 0 : index
    %c0_4 = arith.constant 0 : index
    %c0_5 = arith.constant 0 : index
    %10 = vector.load %arg5[%c0_3, %c0_4, %c0_5] : memref<10x10x128xf32, #tpu.memory_space<vmem>>, vector<1x10x128xf32>
    tpu.vector_store %arg5[%c0_3, %c0_4, %c0_5], %9 {strides = array<i32>} : memref<10x10x128xf32, #tpu.memory_space<vmem>>, vector<1x10x128xf32>,
    %cst_6 = arith.constant 0.000000e+00 : f32
    %11 = vector.broadcast %cst_6 : f32 to vector<1x10x128xf32>
    %c9 = arith.constant 9 : index
    %c0_7 = arith.constant 0 : index
    %c0_8 = arith.constant 0 : index
    %12 = vector.load %arg5[%c9, %c0_7, %c0_8] : memref<10x10x128xf32, #tpu.memory_space<vmem>>, vector<1x10x128xf32>
    tpu.vector_store %arg5[%c9, %c0_7, %c0_8], %11 {strides = array<i32>} : memref<10x10x128xf32, #tpu.memory_space<vmem>>, vector<1x10x128xf32>,
    %cst_9 = arith.constant 0.000000e+00 : f32
    %13 = vector.broadcast %cst_9 : f32 to vector<10x1x128xf32>
    %c0_10 = arith.constant 0 : index
    %c0_11 = arith.constant 0 : index
    %c0_12 = arith.constant 0 : index
    %14 = vector.load %arg5[%c0_10, %c0_11, %c0_12] : memref<10x10x128xf32, #tpu.memory_space<vmem>>, vector<10x1x128xf32>
    tpu.vector_store %arg5[%c0_10, %c0_11, %c0_12], %13 {strides = array<i32>} : memref<10x10x128xf32, #tpu.memory_space<vmem>>, vector<10x1x128xf32>,
    %cst_13 = arith.constant 0.000000e+00 : f32
    %15 = vector.broadcast %cst_13 : f32 to vector<10x1x128xf32>
    %c0_14 = arith.constant 0 : index
    %c9_15 = arith.constant 9 : index
    %c0_16 = arith.constant 0 : index
    %16 = vector.load %arg5[%c0_14, %c9_15, %c0_16] : memref<10x10x128xf32, #tpu.memory_space<vmem>>, vector<10x1x128xf32>
    tpu.vector_store %arg5[%c0_14, %c9_15, %c0_16], %15 {strides = array<i32>} : memref<10x10x128xf32, #tpu.memory_space<vmem>>, vector<10x1x128xf32>,
    %c1 = arith.constant 1 : index
    %c1_17 = arith.constant 1 : index
    %c0_18 = arith.constant 0 : index
    %17 = vector.load %arg5[%c1, %c1_17, %c0_18] : memref<10x10x128xf32, #tpu.memory_space<vmem>>, vector<8x8x128xf32>
    tpu.vector_store %arg5[%c1, %c1_17, %c0_18], %8 {strides = array<i32>} : memref<10x10x128xf32, #tpu.memory_space<vmem>>, vector<8x8x128xf32>,
    %cst_19 = arith.constant 0.000000e+00 : f32
    %18 = vector.broadcast %cst_19 : f32 to vector<64x128xf32>
    %c0_20 = arith.constant 0 : index
    %c0_21 = arith.constant 0 : index
    %19 = vector.load %arg6[%c0_20, %c0_21] : memref<64x128xf32, #tpu.memory_space<vmem>>, vector<64x128xf32>
    tpu.vector_store %arg6[%c0_20, %c0_21], %18 {strides = array<i32>} : memref<64x128xf32, #tpu.memory_space<vmem>>, vector<64x128xf32>,
    %c0_22 = arith.constant 0 : index
    %c0_23 = arith.constant 0 : index
    %c0_24 = arith.constant 0 : index
    %20 = vector.load %arg5[%c0_22, %c0_23, %c0_24] : memref<10x10x128xf32, #tpu.memory_space<vmem>>, vector<8x8x128xf32>
    %21 = vector.shape_cast %20 : vector<8x8x128xf32> to vector<64x128xf32>
    %c0_25 = arith.constant 0 : index
    %c0_26 = arith.constant 0 : index
    %22 = vector.load %arg6[%c0_25, %c0_26] : memref<64x128xf32, #tpu.memory_space<vmem>>, vector<64x128xf32>
    %c0_27 = arith.constant 0 : index
    %c0_28 = arith.constant 0 : index
    %23 = vector.load %arg2[%c0_27, %c0_28] : memref<1152x128xf32, #tpu.memory_space<vmem>>, vector<128x128xf32>
    %cst_29 = arith.constant dense<0.000000e+00> : vector<64x128xf32>
    %24 = tpu.matmul %21, %23, %cst_29 {dimension_numbers = #tpu.dot_dimension_numbers<[1], [0], [0], [1], [0, 0, 1, 1], [], []>} : vector<64x128xf32>, vector<128x128xf32>, vector<64x128xf32> -> vector<64x128xf32>
    %25 = arith.addf %22, %24 : vector<64x128xf32>
    %c0_30 = arith.constant 0 : index
    %c0_31 = arith.constant 0 : index
    %26 = vector.load %arg6[%c0_30, %c0_31] : memref<64x128xf32, #tpu.memory_space<vmem>>, vector<64x128xf32>
    tpu.vector_store %arg6[%c0_30, %c0_31], %25 {strides = array<i32>} : memref<64x128xf32, #tpu.memory_space<vmem>>, vector<64x128xf32>,
    %c0_32 = arith.constant 0 : index
    %c1_33 = arith.constant 1 : index
    %c0_34 = arith.constant 0 : index
    %27 = vector.load %arg5[%c0_32, %c1_33, %c0_34] : memref<10x10x128xf32, #tpu.memory_space<vmem>>, vector<8x8x128xf32>
    %28 = vector.shape_cast %27 : vector<8x8x128xf32> to vector<64x128xf32>
    %c0_35 = arith.constant 0 : index
    %c0_36 = arith.constant 0 : index
    %29 = vector.load %arg6[%c0_35, %c0_36] : memref<64x128xf32, #tpu.memory_space<vmem>>, vector<64x128xf32>
    %c128 = arith.constant 128 : index
    %c0_37 = arith.constant 0 : index
    %30 = vector.load %arg2[%c128, %c0_37] : memref<1152x128xf32, #tpu.memory_space<vmem>>, vector<128x128xf32>
    %cst_38 = arith.constant dense<0.000000e+00> : vector<64x128xf32>
    %31 = tpu.matmul %28, %30, %cst_38 {dimension_numbers = #tpu.dot_dimension_numbers<[1], [0], [0], [1], [0, 0, 1, 1], [], []>} : vector<64x128xf32>, vector<128x128xf32>, vector<64x128xf32> -> vector<64x128xf32>
    %32 = arith.addf %29, %31 : vector<64x128xf32>
    %c0_39 = arith.constant 0 : index
    %c0_40 = arith.constant 0 : index
    %33 = vector.load %arg6[%c0_39, %c0_40] : memref<64x128xf32, #tpu.memory_space<vmem>>, vector<64x128xf32>
    tpu.vector_store %arg6[%c0_39, %c0_40], %32 {strides = array<i32>} : memref<64x128xf32, #tpu.memory_space<vmem>>, vector<64x128xf32>,
    %c0_41 = arith.constant 0 : index
    %c2 = arith.constant 2 : index
    %c0_42 = arith.constant 0 : index
    %34 = vector.load %arg5[%c0_41, %c2, %c0_42] : memref<10x10x128xf32, #tpu.memory_space<vmem>>, vector<8x8x128xf32>
    %35 = vector.shape_cast %34 : vector<8x8x128xf32> to vector<64x128xf32>
    %c0_43 = arith.constant 0 : index
    %c0_44 = arith.constant 0 : index
    %36 = vector.load %arg6[%c0_43, %c0_44] : memref<64x128xf32, #tpu.memory_space<vmem>>, vector<64x128xf32>
    %c256 = arith.constant 256 : index
    %c0_45 = arith.constant 0 : index
    %37 = vector.load %arg2[%c256, %c0_45] : memref<1152x128xf32, #tpu.memory_space<vmem>>, vector<128x128xf32>
    %cst_46 = arith.constant dense<0.000000e+00> : vector<64x128xf32>
    %38 = tpu.matmul %35, %37, %cst_46 {dimension_numbers = #tpu.dot_dimension_numbers<[1], [0], [0], [1], [0, 0, 1, 1], [], []>} : vector<64x128xf32>, vector<128x128xf32>, vector<64x128xf32> -> vector<64x128xf32>
    %39 = arith.addf %36, %38 : vector<64x128xf32>
    %c0_47 = arith.constant 0 : index
    %c0_48 = arith.constant 0 : index
    %40 = vector.load %arg6[%c0_47, %c0_48] : memref<64x128xf32, #tpu.memory_space<vmem>>, vector<64x128xf32>
    tpu.vector_store %arg6[%c0_47, %c0_48], %39 {strides = array<i32>} : memref<64x128xf32, #tpu.memory_space<vmem>>, vector<64x128xf32>,
    %c1_49 = arith.constant 1 : index
    %c0_50 = arith.constant 0 : index
    %c0_51 = arith.constant 0 : index
    %41 = vector.load %arg5[%c1_49, %c0_50, %c0_51] : memref<10x10x128xf32, #tpu.memory_space<vmem>>, vector<8x8x128xf32>
    %42 = vector.shape_cast %41 : vector<8x8x128xf32> to vector<64x128xf32>
    %c0_52 = arith.constant 0 : index
    %c0_53 = arith.constant 0 : index
    %43 = vector.load %arg6[%c0_52, %c0_53] : memref<64x128xf32, #tpu.memory_space<vmem>>, vector<64x128xf32>
    %c384 = arith.constant 384 : index
    %c0_54 = arith.constant 0 : index
    %44 = vector.load %arg2[%c384, %c0_54] : memref<1152x128xf32, #tpu.memory_space<vmem>>, vector<128x128xf32>
    %cst_55 = arith.constant dense<0.000000e+00> : vector<64x128xf32>
    %45 = tpu.matmul %42, %44, %cst_55 {dimension_numbers = #tpu.dot_dimension_numbers<[1], [0], [0], [1], [0, 0, 1, 1], [], []>} : vector<64x128xf32>, vector<128x128xf32>, vector<64x128xf32> -> vector<64x128xf32>
    %46 = arith.addf %43, %45 : vector<64x128xf32>
    %c0_56 = arith.constant 0 : index
    %c0_57 = arith.constant 0 : index
    %47 = vector.load %arg6[%c0_56, %c0_57] : memref<64x128xf32, #tpu.memory_space<vmem>>, vector<64x128xf32>
    tpu.vector_store %arg6[%c0_56, %c0_57], %46 {strides = array<i32>} : memref<64x128xf32, #tpu.memory_space<vmem>>, vector<64x128xf32>,
    %c1_58 = arith.constant 1 : index
    %c1_59 = arith.constant 1 : index
    %c0_60 = arith.constant 0 : index
    %48 = vector.load %arg5[%c1_58, %c1_59, %c0_60] : memref<10x10x128xf32, #tpu.memory_space<vmem>>, vector<8x8x128xf32>
    %49 = vector.shape_cast %48 : vector<8x8x128xf32> to vector<64x128xf32>
    %c0_61 = arith.constant 0 : index
    %c0_62 = arith.constant 0 : index
    %50 = vector.load %arg6[%c0_61, %c0_62] : memref<64x128xf32, #tpu.memory_space<vmem>>, vector<64x128xf32>
    %c512 = arith.constant 512 : index
    %c0_63 = arith.constant 0 : index
    %51 = vector.load %arg2[%c512, %c0_63] : memref<1152x128xf32, #tpu.memory_space<vmem>>, vector<128x128xf32>
    %cst_64 = arith.constant dense<0.000000e+00> : vector<64x128xf32>
    %52 = tpu.matmul %49, %51, %cst_64 {dimension_numbers = #tpu.dot_dimension_numbers<[1], [0], [0], [1], [0, 0, 1, 1], [], []>} : vector<64x128xf32>, vector<128x128xf32>, vector<64x128xf32> -> vector<64x128xf32>
    %53 = arith.addf %50, %52 : vector<64x128xf32>
    %c0_65 = arith.constant 0 : index
    %c0_66 = arith.constant 0 : index
    %54 = vector.load %arg6[%c0_65, %c0_66] : memref<64x128xf32, #tpu.memory_space<vmem>>, vector<64x128xf32>
    tpu.vector_store %arg6[%c0_65, %c0_66], %53 {strides = array<i32>} : memref<64x128xf32, #tpu.memory_space<vmem>>, vector<64x128xf32>,
    %c1_67 = arith.constant 1 : index
    %c2_68 = arith.constant 2 : index
    %c0_69 = arith.constant 0 : index
    %55 = vector.load %arg5[%c1_67, %c2_68, %c0_69] : memref<10x10x128xf32, #tpu.memory_space<vmem>>, vector<8x8x128xf32>
    %56 = vector.shape_cast %55 : vector<8x8x128xf32> to vector<64x128xf32>
    %c0_70 = arith.constant 0 : index
    %c0_71 = arith.constant 0 : index
    %57 = vector.load %arg6[%c0_70, %c0_71] : memref<64x128xf32, #tpu.memory_space<vmem>>, vector<64x128xf32>
    %c640 = arith.constant 640 : index
    %c0_72 = arith.constant 0 : index
    %58 = vector.load %arg2[%c640, %c0_72] : memref<1152x128xf32, #tpu.memory_space<vmem>>, vector<128x128xf32>
    %cst_73 = arith.constant dense<0.000000e+00> : vector<64x128xf32>
    %59 = tpu.matmul %56, %58, %cst_73 {dimension_numbers = #tpu.dot_dimension_numbers<[1], [0], [0], [1], [0, 0, 1, 1], [], []>} : vector<64x128xf32>, vector<128x128xf32>, vector<64x128xf32> -> vector<64x128xf32>
    %60 = arith.addf %57, %59 : vector<64x128xf32>
    %c0_74 = arith.constant 0 : index
    %c0_75 = arith.constant 0 : index
    %61 = vector.load %arg6[%c0_74, %c0_75] : memref<64x128xf32, #tpu.memory_space<vmem>>, vector<64x128xf32>
    tpu.vector_store %arg6[%c0_74, %c0_75], %60 {strides = array<i32>} : memref<64x128xf32, #tpu.memory_space<vmem>>, vector<64x128xf32>,
    %c2_76 = arith.constant 2 : index
    %c0_77 = arith.constant 0 : index
    %c0_78 = arith.constant 0 : index
    %62 = vector.load %arg5[%c2_76, %c0_77, %c0_78] : memref<10x10x128xf32, #tpu.memory_space<vmem>>, vector<8x8x128xf32>
    %63 = vector.shape_cast %62 : vector<8x8x128xf32> to vector<64x128xf32>
    %c0_79 = arith.constant 0 : index
    %c0_80 = arith.constant 0 : index
    %64 = vector.load %arg6[%c0_79, %c0_80] : memref<64x128xf32, #tpu.memory_space<vmem>>, vector<64x128xf32>
    %c768 = arith.constant 768 : index
    %c0_81 = arith.constant 0 : index
    %65 = vector.load %arg2[%c768, %c0_81] : memref<1152x128xf32, #tpu.memory_space<vmem>>, vector<128x128xf32>
    %cst_82 = arith.constant dense<0.000000e+00> : vector<64x128xf32>
    %66 = tpu.matmul %63, %65, %cst_82 {dimension_numbers = #tpu.dot_dimension_numbers<[1], [0], [0], [1], [0, 0, 1, 1], [], []>} : vector<64x128xf32>, vector<128x128xf32>, vector<64x128xf32> -> vector<64x128xf32>
    %67 = arith.addf %64, %66 : vector<64x128xf32>
    %c0_83 = arith.constant 0 : index
    %c0_84 = arith.constant 0 : index
    %68 = vector.load %arg6[%c0_83, %c0_84] : memref<64x128xf32, #tpu.memory_space<vmem>>, vector<64x128xf32>
    tpu.vector_store %arg6[%c0_83, %c0_84], %67 {strides = array<i32>} : memref<64x128xf32, #tpu.memory_space<vmem>>, vector<64x128xf32>,
    %c2_85 = arith.constant 2 : index
    %c1_86 = arith.constant 1 : index
    %c0_87 = arith.constant 0 : index
    %69 = vector.load %arg5[%c2_85, %c1_86, %c0_87] : memref<10x10x128xf32, #tpu.memory_space<vmem>>, vector<8x8x128xf32>
    %70 = vector.shape_cast %69 : vector<8x8x128xf32> to vector<64x128xf32>
    %c0_88 = arith.constant 0 : index
    %c0_89 = arith.constant 0 : index
    %71 = vector.load %arg6[%c0_88, %c0_89] : memref<64x128xf32, #tpu.memory_space<vmem>>, vector<64x128xf32>
    %c896 = arith.constant 896 : index
    %c0_90 = arith.constant 0 : index
    %72 = vector.load %arg2[%c896, %c0_90] : memref<1152x128xf32, #tpu.memory_space<vmem>>, vector<128x128xf32>
    %cst_91 = arith.constant dense<0.000000e+00> : vector<64x128xf32>
    %73 = tpu.matmul %70, %72, %cst_91 {dimension_numbers = #tpu.dot_dimension_numbers<[1], [0], [0], [1], [0, 0, 1, 1], [], []>} : vector<64x128xf32>, vector<128x128xf32>, vector<64x128xf32> -> vector<64x128xf32>
    %74 = arith.addf %71, %73 : vector<64x128xf32>
    %c0_92 = arith.constant 0 : index
    %c0_93 = arith.constant 0 : index
    %75 = vector.load %arg6[%c0_92, %c0_93] : memref<64x128xf32, #tpu.memory_space<vmem>>, vector<64x128xf32>
    tpu.vector_store %arg6[%c0_92, %c0_93], %74 {strides = array<i32>} : memref<64x128xf32, #tpu.memory_space<vmem>>, vector<64x128xf32>,
    %c2_94 = arith.constant 2 : index
    %c2_95 = arith.constant 2 : index
    %c0_96 = arith.constant 0 : index
    %76 = vector.load %arg5[%c2_94, %c2_95, %c0_96] : memref<10x10x128xf32, #tpu.memory_space<vmem>>, vector<8x8x128xf32>
    %77 = vector.shape_cast %76 : vector<8x8x128xf32> to vector<64x128xf32>
    %c0_97 = arith.constant 0 : index
    %c0_98 = arith.constant 0 : index
    %78 = vector.load %arg6[%c0_97, %c0_98] : memref<64x128xf32, #tpu.memory_space<vmem>>, vector<64x128xf32>
    %c1024 = arith.constant 1024 : index
    %c0_99 = arith.constant 0 : index
    %79 = vector.load %arg2[%c1024, %c0_99] : memref<1152x128xf32, #tpu.memory_space<vmem>>, vector<128x128xf32>
    %cst_100 = arith.constant dense<0.000000e+00> : vector<64x128xf32>
    %80 = tpu.matmul %77, %79, %cst_100 {dimension_numbers = #tpu.dot_dimension_numbers<[1], [0], [0], [1], [0, 0, 1, 1], [], []>} : vector<64x128xf32>, vector<128x128xf32>, vector<64x128xf32> -> vector<64x128xf32>
    %81 = arith.addf %78, %80 : vector<64x128xf32>
    %c0_101 = arith.constant 0 : index
    %c0_102 = arith.constant 0 : index
    %82 = vector.load %arg6[%c0_101, %c0_102] : memref<64x128xf32, #tpu.memory_space<vmem>>, vector<64x128xf32>
    tpu.vector_store %arg6[%c0_101, %c0_102], %81 {strides = array<i32>} : memref<64x128xf32, #tpu.memory_space<vmem>>, vector<64x128xf32>,
    %c0_103 = arith.constant 0 : index
    %c0_104 = arith.constant 0 : index
    %83 = vector.load %arg6[%c0_103, %c0_104] : memref<64x128xf32, #tpu.memory_space<vmem>>, vector<64x128xf32>
    %c0_105 = arith.constant 0 : index
    %c0_106 = arith.constant 0 : index
    %c0_107 = arith.constant 0 : index
    %84 = vector.load %arg3[%c0_105, %c0_106, %c0_107] : memref<1x64x128xf32, #tpu.memory_space<vmem>>, vector<1x64x128xf32>
    %85 = vector.shape_cast %84 : vector<1x64x128xf32> to vector<64x128xf32>
    %86 = vector.shape_cast %83 : vector<64x128xf32> to vector<1x64x128xf32>
    tpu.vector_store %arg3[%c0_105, %c0_106, %c0_107], %86 {strides = array<i32>} : memref<1x64x128xf32, #tpu.memory_space<vmem>>, vector<1x64x128xf32>,
    %cst_108 = arith.constant dense<0.000000e+00> : vector<128xf32>
    %87 = vector.multi_reduction <add>, %83, %cst_108 [0] : vector<64x128xf32> to vector<128xf32>
    %88 = vector.shape_cast %87 : vector<128xf32> to vector<1x128xf32>
    %c0_109 = arith.constant 0 : index
    %c0_110 = arith.constant 0 : index
    %c0_111 = arith.constant 0 : index
    %89 = vector.load %arg4[%c0_109, %c0_110, %c0_111] : memref<1x2x128xf32, #tpu.memory_space<vmem>>, vector<1x1x128xf32>
    %90 = vector.shape_cast %89 : vector<1x1x128xf32> to vector<1x128xf32>
    %91 = vector.shape_cast %88 : vector<1x128xf32> to vector<1x1x128xf32>
    tpu.vector_store %arg4[%c0_109, %c0_110, %c0_111], %91 {strides = array<i32>} : memref<1x2x128xf32, #tpu.memory_space<vmem>>, vector<1x1x128xf32>,
    %92 = arith.mulf %83, %83 : vector<64x128xf32>
    %cst_112 = arith.constant dense<0.000000e+00> : vector<128xf32>
    %93 = vector.multi_reduction <add>, %92, %cst_112 [0] : vector<64x128xf32> to vector<128xf32>
    %94 = vector.shape_cast %93 : vector<128xf32> to vector<1x128xf32>
    %c0_113 = arith.constant 0 : index
    %c1_114 = arith.constant 1 : index
    %c0_115 = arith.constant 0 : index
    %95 = vector.load %arg4[%c0_113, %c1_114, %c0_115] : memref<1x2x128xf32, #tpu.memory_space<vmem>>, vector<1x1x128xf32>
    %96 = vector.shape_cast %95 : vector<1x1x128xf32> to vector<1x128xf32>
    %97 = vector.shape_cast %94 : vector<1x128xf32> to vector<1x1x128xf32>
    tpu.vector_store %arg4[%c0_113, %c1_114, %c0_115], %97 {strides = array<i32>} : memref<1x2x128xf32, #tpu.memory_space<vmem>>, vector<1x1x128xf32>,
    return
  }
  func.func @transform_0(%arg0: i32) -> (i32, i32, i32, i32) {
    %c0_i32 = arith.constant 0 : i32
    %c0_i32_0 = arith.constant 0 : i32
    %c0_i32_1 = arith.constant 0 : i32
    %c0_i32_2 = arith.constant 0 : i32
    return %arg0, %c0_i32, %c0_i32_0, %c0_i32_1 : i32, i32, i32, i32
  }
  func.func @transform_1(%arg0: i32) -> (i32, i32) {
    %c0_i32 = arith.constant 0 : i32
    %c0_i32_0 = arith.constant 0 : i32
    %c0_i32_1 = arith.constant 0 : i32
    return %c0_i32, %c0_i32_0 : i32, i32
  }
  func.func @transform_2(%arg0: i32) -> (i32, i32, i32) {
    %c0_i32 = arith.constant 0 : i32
    %c0_i32_0 = arith.constant 0 : i32
    %c0_i32_1 = arith.constant 0 : i32
    return %arg0, %c0_i32, %c0_i32_0 : i32, i32, i32
  }
  func.func @transform_3(%arg0: i32) -> (i32, i32, i32) {
    %c0_i32 = arith.constant 0 : i32
    %c0_i32_0 = arith.constant 0 : i32
    %c0_i32_1 = arith.constant 0 : i32
    return %arg0, %c0_i32, %c0_i32_0 : i32, i32, i32
  }
}

</mosaic_0001>

<llo_original>
// kernel: tpu_custom_call.1
$region0: #{tpu_custom_call.1}
  #allocation0 [shape = 'u32[]', space=smem, size = 0x4, offset = 0x4, fixed_abs, tag = 'smem constant byte address 0x4 - core index']
  #allocation1 [shape = 'u32[72,128]{1,0:T(1,128)}', space=vmem, size = 0x9000, scoped, tag = 'internal scratch']
  #allocation2 [shape = 'f32[10,10,128]{2,1,0:T(8,128)}', space=vmem, size = 0x14000, scoped, tag = 'scratch operand']
  #allocation3 [shape = 'f32[64,128]{1,0:T(8,128)}', space=vmem, size = 0x8000, scoped, tag = 'scratch operand']
  %s0 = inlined_call_operand.hbm [shape: f32[16,2,8,256], index: 0, kind: input, shape index: {}]
  %s1 = inlined_call_operand.hbm [shape: f32[1152,128], index: 1, kind: input, shape index: {}]
  %s2 = inlined_call_operand.hbm [shape: f32[2,64,128], index: 2, kind: output, shape index: {0}]
  %s3 = inlined_call_operand.hbm [shape: f32[2,2,128], index: 3, kind: output, shape index: {1}]
  %4 = xla_tuple %s2, %s3
  %s5 = sld [smem:[#allocation0]]
  $region57: #{tpu_custom_call.1} parent=0
    _
  %s7 = ssub.s32 1, %s5
  %s8 = scalar_select 0, %s7, %s5
  $region1: #{tpu_custom_call.1} parent=0
    #allocation4 [shape = 'u8[262144]{0}', space=vmem, size = 0x40000, scoped, tag = 'input window, operand 0']
    #allocation5 [shape = 's32[2]{0}', space=sflag, size = 0x8, scoped, tag = 'scoped memory for tpu_custom_call.1']
    #allocation6 [shape = 's32[2]{0}', space=sflag, size = 0x8, scoped, tag = 'scoped memory for tpu_custom_call.1']
    #allocation7 [shape = 'u8[589824]{0}', space=vmem, size = 0x90000, scoped, tag = 'input window, operand 1, single buffered']
    #allocation8 [shape = 's32[1]{0}', space=sflag, size = 0x4, scoped, tag = 'scoped memory for tpu_custom_call.1']
    #allocation9 [shape = 'u8[65536]{0}', space=vmem, size = 0x10000, scoped, tag = 'output window, operand 0']
    #allocation10 [shape = 'u8[2048]{0}', space=vmem, size = 0x800, scoped, tag = 'output window, operand 1']
    #allocation11 [shape = 's32[2]{0}', space=sflag, size = 0x8, scoped, tag = 'scoped memory for tpu_custom_call.1']
    %9 = vsyncpa [#allocation5], 0
    %s10 = scalar_lea.sflag [#allocation5], 1
    %11 = vsyncpa %s10, 0
    %12 = vsyncpa [#allocation8], 0
    %13 = vsyncpa [#allocation6], 0
    %s14 = scalar_lea.sflag [#allocation6], 1
    %15 = vsyncpa %s14, 0
    %16 = vsyncpa [#allocation11], 0
    %s17 = scalar_lea.sflag [#allocation11], 1
    %18 = vsyncpa %s17, 0
    loop: start=0, step=1, limit=4
    $region2: #{tpu_custom_call.1} parent=1 // loop_pre_header
      _
    $region3: #{tpu_custom_call.1} parent=1 // loop_header
      %s20 = sphi 0, %s24
      %p21 = scmp.ge.s32.totalorder %s20, 4
      %s30 = sphi 0, %s32
      %s33 = sphi 0, %s30
      %s34 = sphi 0, %s33
      %s50 = sphi 0, %s34
      %s54 = sphi 0, %s54
      %s56 = sphi 0, %s54
      %s57 = sphi 0, %s56
      %s71 = sphi 0, %s57
      %s77 = sphi 0, %s79
      %s80 = sphi 0, %s77
      %s81 = sphi 0, %s80
      %s97 = sphi 0, %s81
      %s103 = sphi 0, %s105
      %s106 = sphi 0, %s103
      %s107 = sphi 0, %s106
      %s123 = sphi 0, %s107
    $region4: #{tpu_custom_call.1} parent=1 // loop_header_branch
      %23 = sbr.rel (%p21) target = $region8
    $region5: #{tpu_custom_call.1} parent=1 // loop_body
      %s25 = ssub.s32 %s20, 1
      %s26 = ssub.s32 %s20, 2
      %s27 = sadd.s32 %s20, 1
      %s28 = ssub.s32 %s20, %s27
      %p29 = scmp.eq.s32.totalorder %s28, 0
      %s31 = sadd.s32 %s30, 1
      %s32 = scalar_select %p29, %s30, %s31
      %p35 = pneg %p29
      %p36 = scmp.eq.s32.totalorder %s20, 1
      %p37 = por %p35, %p36
      %p38 = scmp.ne.s32.totalorder %s30, %s33
      %p39 = scmp.eq.s32.totalorder %s20, 0
      %p40 = por %p38, %p39
      %p41 = scmp.ne.s32.totalorder %s30, %s33
      %p42 = scmp.eq.s32.totalorder %s25, 1
      %p43 = por %p41, %p42
      %p44 = scmp.ne.s32.totalorder %s33, %s34
      %p45 = scmp.eq.s32.totalorder %s25, 0
      %p46 = por %p44, %p45
      %p47 = scmp.ne.s32.totalorder %s33, %s34
      %p48 = scmp.eq.s32.totalorder %s26, 1
      %p49 = por %p47, %p48
      %p51 = scmp.ne.s32.totalorder %s34, %s50
      %p52 = scmp.eq.s32.totalorder %s26, 0
      %p53 = por %p51, %p52
      %s55 = sadd.s32 %s54, 1
      %p58 = scmp.eq.s32.totalorder %s20, 1
      %p59 = scmp.ne.s32.totalorder %s54, %s56
      %p60 = scmp.eq.s32.totalorder %s20, 0
      %p61 = por %p59, %p60
      %p62 = scmp.ne.s32.totalorder %s54, %s56
      %p63 = scmp.eq.s32.totalorder %s25, 1
      %p64 = por %p62, %p63
      %p65 = scmp.ne.s32.totalorder %s56, %s57
      %p66 = scmp.eq.s32.totalorder %s25, 0
      %p67 = por %p65, %p66
      %p68 = scmp.ne.s32.totalorder %s56, %s57
      %p69 = scmp.eq.s32.totalorder %s26, 1
      %p70 = por %p68, %p69
      %p72 = scmp.ne.s32.totalorder %s57, %s71
      %p73 = scmp.eq.s32.totalorder %s26, 0
      %p74 = por %p72, %p73
      %s75 = ssub.s32 %s20, %s27
      %p76 = scmp.eq.s32.totalorder %s75, 0
      %s78 = sadd.s32 %s77, 1
      %s79 = scalar_select %p76, %s77, %s78
      %p82 = pneg %p76
      %p83 = scmp.eq.s32.totalorder %s20, 1
      %p84 = por %p82, %p83
      %p85 = scmp.ne.s32.totalorder %s77, %s80
      %p86 = scmp.eq.s32.totalorder %s20, 0
      %p87 = por %p85, %p86
      %p88 = scmp.ne.s32.totalorder %s77, %s80
      %p89 = scmp.eq.s32.totalorder %s25, 1
      %p90 = por %p88, %p89
      %p91 = scmp.ne.s32.totalorder %s80, %s81
      %p92 = scmp.eq.s32.totalorder %s25, 0
      %p93 = por %p91, %p92
      %p94 = scmp.ne.s32.totalorder %s80, %s81
      %p95 = scmp.eq.s32.totalorder %s26, 1
      %p96 = por %p94, %p95
      %p98 = scmp.ne.s32.totalorder %s81, %s97
      %p99 = scmp.eq.s32.totalorder %s26, 0
      %p100 = por %p98, %p99
      %s101 = ssub.s32 %s20, %s27
      %p102 = scmp.eq.s32.totalorder %s101, 0
      %s104 = sadd.s32 %s103, 1
      %s105 = scalar_select %p102, %s103, %s104
      %p108 = pneg %p102
      %p109 = scmp.eq.s32.totalorder %s20, 1
      %p110 = por %p108, %p109
      %p111 = scmp.ne.s32.totalorder %s103, %s106
      %p112 = scmp.eq.s32.totalorder %s20, 0
      %p113 = por %p111, %p112
      %p114 = scmp.ne.s32.totalorder %s103, %s106
      %p115 = scmp.eq.s32.totalorder %s25, 1
      %p116 = por %p114, %p115
      %p117 = scmp.ne.s32.totalorder %s106, %s107
      %p118 = scmp.eq.s32.totalorder %s25, 0
      %p119 = por %p117, %p118
      %p120 = scmp.ne.s32.totalorder %s106, %s107
      %p121 = scmp.eq.s32.totalorder %s26, 1
      %p122 = por %p120, %p121
      %p124 = scmp.ne.s32.totalorder %s107, %s123
      %p125 = scmp.eq.s32.totalorder %s26, 0
      %p126 = por %p124, %p125
      %p127 = scmp.le.s32.totalorder 1, %s20
      %p128 = scmp.lt.s32.totalorder %s20, 3
      %p129 = pnand %p127, %p128
      %p130 = pneg %p129
      // Predicated region
      $region9: #{tpu_custom_call.1} parent=5 // pred_check
        _
      $region10: #{tpu_custom_call.1} parent=5 // pred_check_branch
        %132 = sbr.rel (%p129) target = $region12
      $region11: #{tpu_custom_call.1} parent=5 // pred_region
        %s133 = ssub.s32 %s20, 1
        // Predicated region
        $region13: #{tpu_custom_call.1} parent=11 // pred_check
          %p134 = pneg %p67
        $region14: #{tpu_custom_call.1} parent=11 // pred_check_branch
          %136 = sbr.rel (%p134) target = $region16
        $region15: #{tpu_custom_call.1} parent=11 // pred_region
          %138 = vsyncadd [#allocation8], 0
          %s139 = sshll.u32 %s1, 4
          %s140 = int_to_ptr.hbm [resolvable:$true] %s139
          %s141 = sshll.u32 [#allocation7], 4
          %s142 = int_to_ptr.vmem [resolvable:$true] %s141
          %147 = dma.hbm_to_vmem [thread:$0]  %s140, 18432, %s142, [#allocation8], 128, 128, 8
        $region16: #{tpu_custom_call.1} parent=11 // pred_fallthru
          _
      $region12: #{tpu_custom_call.1} parent=5 // pred_fallthru
        _
      %p148 = scmp.lt.s32.totalorder %s20, 2
      // Predicated region
      $region17: #{tpu_custom_call.1} parent=5 // pred_check
        %p149 = pneg %p148
      $region18: #{tpu_custom_call.1} parent=5 // pred_check_branch
        %151 = sbr.rel (%p149) target = $region20
      $region19: #{tpu_custom_call.1} parent=5 // pred_region
        // Predicated region
        $region21: #{tpu_custom_call.1} parent=19 // pred_check
          %p152 = pneg %p40
        $region22: #{tpu_custom_call.1} parent=19 // pred_check_branch
          %154 = sbr.rel (%p152) target = $region24
        $region23: #{tpu_custom_call.1} parent=19 // pred_region
          %s155 = sand.u32 %s30, 1
          %s156 = scalar_lea.sflag [#allocation5], %s155
          %s157 = sand.u32 %s30, 1
          %s158 = smul.addr %s157, 256
          %s159 = scalar_lea.vmem [#allocation4], %s158
          %s160 = smul.u32 8, %s20
          %162 = vsyncadd %s156, 0
          %s163 = smul.addr %s160, 4
          %s164 = smul.addr %s163, 8
          %s165 = scalar_lea.hbm %s0, %s164
          %s166 = sshll.u32 %s165, 4
          %s167 = int_to_ptr.hbm [resolvable:$true] %s166
          %s168 = sshll.u32 %s159, 4
          %s169 = int_to_ptr.vmem [resolvable:$true] %s168
          %174 = dma.hbm_to_vmem [thread:$0]  %s167, 4096, %s169, %s156, 256, 256, 16
        $region24: #{tpu_custom_call.1} parent=19 // pred_fallthru
          _
      $region20: #{tpu_custom_call.1} parent=5 // pred_fallthru
        _
      %p175 = scmp.le.s32.totalorder 1, %s20
      %p176 = scmp.lt.s32.totalorder %s20, 3
      %p177 = pnand %p175, %p176
      %p178 = pneg %p177
      // Predicated region
      $region25: #{tpu_custom_call.1} parent=5 // pred_check
        _
      $region26: #{tpu_custom_call.1} parent=5 // pred_check_branch
        %180 = sbr.rel (%p177) target = $region28
      $region27: #{tpu_custom_call.1} parent=5 // pred_region
        %s181 = ssub.s32 %s20, 1
        %s182 = sand.u32 %s33, 1
        %s183 = scalar_lea.sflag [#allocation5], %s182
        %s184 = sand.u32 %s33, 1
        %s185 = smul.addr %s184, 256
        %s186 = scalar_lea.vmem [#allocation4], %s185
        // Predicated region
        $region29: #{tpu_custom_call.1} parent=27 // pred_check
          %p187 = pneg %p46
        $region30: #{tpu_custom_call.1} parent=27 // pred_check_branch
          %189 = sbr.rel (%p187) target = $region32
        $region31: #{tpu_custom_call.1} parent=27 // pred_region
          %191 = dma.done %s183, 4096
        $region32: #{tpu_custom_call.1} parent=27 // pred_fallthru
          _
        // Predicated region
        $region33: #{tpu_custom_call.1} parent=27 // pred_check
          %p192 = pneg %p67
        $region34: #{tpu_custom_call.1} parent=27 // pred_check_branch
          %194 = sbr.rel (%p192) target = $region36
        $region35: #{tpu_custom_call.1} parent=27 // pred_region
          %196 = dma.done [#allocation8], 18432
        $region36: #{tpu_custom_call.1} parent=27 // pred_fallthru
          _
        %s197 = sand.u32 %s33, 1
        %s198 = scalar_lea.sflag [#allocation5], %s197
        %s199 = sand.u32 %s33, 1
        %s200 = smul.addr %s199, 256
        %s201 = scalar_lea.vmem [#allocation4], %s200
        %p202 = pneg %p46
        %p203 = pneg %p43
        %p204 = pneg %p67
        %p205 = pneg %p64
        %p206 = pneg %p93
        %p207 = pneg %p90
        %s208 = sand.u32 %s80, 1
        %s209 = scalar_lea.sflag [#allocation6], %s208
        %s210 = sand.u32 %s80, 1
        %s211 = smul.addr %s210, 64
        %s212 = scalar_lea.vmem [#allocation9], %s211
        %p213 = pneg %p119
        %p214 = pneg %p116
        %s215 = sand.u32 %s106, 1
        %s216 = scalar_lea.sflag [#allocation11], %s215
        %s217 = sand.u32 %s106, 1
        %s218 = smul.addr %s217, 2
        %s219 = scalar_lea.vmem [#allocation10], %s218
        %s220 = smul.u32 8, %s25
        %v221 = vld [vmem:[%s186] sm:$0xff]
        %v222 = vld [vmem:[%s186 + $0x8] sm:$0xff]
        %v223 = vld [vmem:[%s186 + $0x10] sm:$0xff]
        %v224 = vld [vmem:[%s186 + $0x18] sm:$0xff]
        %v225 = vld [vmem:[%s186 + $0x20] sm:$0xff]
        %v226 = vld [vmem:[%s186 + $0x28] sm:$0xff]
        %v227 = vld [vmem:[%s186 + $0x30] sm:$0xff]
        %v228 = vld [vmem:[%s186 + $0x38] sm:$0xff]
        %v229 = vld [vmem:[%s186 + $0x40] sm:$0xff]
        %v230 = vld [vmem:[%s186 + $0x48] sm:$0xff]
        %v231 = vld [vmem:[%s186 + $0x50] sm:$0xff]
        %v232 = vld [vmem:[%s186 + $0x58] sm:$0xff]
        %v233 = vld [vmem:[%s186 + $0x60] sm:$0xff]
        %v234 = vld [vmem:[%s186 + $0x68] sm:$0xff]
        %v235 = vld [vmem:[%s186 + $0x70] sm:$0xff]
        %v236 = vld [vmem:[%s186 + $0x78] sm:$0xff]
        %v237 = vld [vmem:[%s186 + $0x80] sm:$0xff]
        %v238 = vld [vmem:[%s186 + $0x88] sm:$0xff]
        %v239 = vld [vmem:[%s186 + $0x90] sm:$0xff]
        %v240 = vld [vmem:[%s186 + $0x98] sm:$0xff]
        %v241 = vld [vmem:[%s186 + $0xa0] sm:$0xff]
        %v242 = vld [vmem:[%s186 + $0xa8] sm:$0xff]
        %v243 = vld [vmem:[%s186 + $0xb0] sm:$0xff]
        %v244 = vld [vmem:[%s186 + $0xb8] sm:$0xff]
        %v245 = vld [vmem:[%s186 + $0xc0] sm:$0xff]
        %v246 = vld [vmem:[%s186 + $0xc8] sm:$0xff]
        %v247 = vld [vmem:[%s186 + $0xd0] sm:$0xff]
        %v248 = vld [vmem:[%s186 + $0xd8] sm:$0xff]
        %v249 = vld [vmem:[%s186 + $0xe0] sm:$0xff]
        %v250 = vld [vmem:[%s186 + $0xe8] sm:$0xff]
        %v251 = vld [vmem:[%s186 + $0xf0] sm:$0xff]
        %v252 = vld [vmem:[%s186 + $0xf8] sm:$0xff]
        %v253 = vmax.f32 %v221, %v223
        %v254 = vmax.f32 %v222, %v224
        %v255 = vmax.f32 %v225, %v227
        %v256 = vmax.f32 %v226, %v228
        %v257 = vmax.f32 %v229, %v231
        %v258 = vmax.f32 %v230, %v232
        %v259 = vmax.f32 %v233, %v235
        %v260 = vmax.f32 %v234, %v236
        %v261 = vmax.f32 %v237, %v239
        %v262 = vmax.f32 %v238, %v240
        %v263 = vmax.f32 %v241, %v243
        %v264 = vmax.f32 %v242, %v244
        %v265 = vmax.f32 %v245, %v247
        %v266 = vmax.f32 %v246, %v248
        %v267 = vmax.f32 %v249, %v251
        %v268 = vmax.f32 %v250, %v252
        %v269 = vmax.f32 %v253, %v254
        %v270 = vmax.f32 %v255, %v256
        %v271 = vmax.f32 %v257, %v258
        %v272 = vmax.f32 %v259, %v260
        %v273 = vmax.f32 %v261, %v262
        %v274 = vmax.f32 %v263, %v264
        %v275 = vmax.f32 %v265, %v266
        %v276 = vmax.f32 %v267, %v268
        %277 = vst [vmem:[#allocation2] sm:$0xff] 0.0
        %278 = vst [vmem:[#allocation2 + $0x8] sm:$0x3] 0.0
        %s279 = scalar_lea.vmem [#allocation2], 144
        %280 = vst [vmem:[%s279] sm:$0xff] 0.0
        %281 = vst [vmem:[%s279 + $0x8] sm:$0x3] 0.0
        %282 = vst [vmem:[#allocation2] sm:$0x1] 0.0
        %283 = vst [vmem:[#allocation2 + $0x10] sm:$0x1] 0.0
        %284 = vst [vmem:[#allocation2 + $0x20] sm:$0x1] 0.0
        %285 = vst [vmem:[#allocation2 + $0x30] sm:$0x1] 0.0
        %286 = vst [vmem:[#allocation2 + $0x40] sm:$0x1] 0.0
        %287 = vst [vmem:[#allocation2 + $0x50] sm:$0x1] 0.0
        %288 = vst [vmem:[#allocation2 + $0x60] sm:$0x1] 0.0
        %289 = vst [vmem:[#allocation2 + $0x70] sm:$0x1] 0.0
        %290 = vst [vmem:[#allocation2 + $0x80] sm:$0x1] 0.0
        %291 = vst [vmem:[#allocation2 + $0x90] sm:$0x1] 0.0
        %292 = vst [vmem:[#allocation2 + $0x9] sm:$0x1] 0.0
        %293 = vst [vmem:[#allocation2 + $0x19] sm:$0x1] 0.0
        %294 = vst [vmem:[#allocation2 + $0x29] sm:$0x1] 0.0
        %295 = vst [vmem:[#allocation2 + $0x39] sm:$0x1] 0.0
        %296 = vst [vmem:[#allocation2 + $0x49] sm:$0x1] 0.0
        %297 = vst [vmem:[#allocation2 + $0x59] sm:$0x1] 0.0
        %298 = vst [vmem:[#allocation2 + $0x69] sm:$0x1] 0.0
        %299 = vst [vmem:[#allocation2 + $0x79] sm:$0x1] 0.0
        %300 = vst [vmem:[#allocation2 + $0x89] sm:$0x1] 0.0
        %301 = vst [vmem:[#allocation2 + $0x99] sm:$0x1] 0.0
        %s302 = scalar_lea.vmem [#allocation2], 16
        %303 = vst [vmem:[%s302 + $0x1] sm:$0xff] %v269
        %304 = vst [vmem:[%s302 + $0x11] sm:$0xff] %v270
        %305 = vst [vmem:[%s302 + $0x21] sm:$0xff] %v271
        %306 = vst [vmem:[%s302 + $0x31] sm:$0xff] %v272
        %307 = vst [vmem:[%s302 + $0x41] sm:$0xff] %v273
        %308 = vst [vmem:[%s302 + $0x51] sm:$0xff] %v274
        %309 = vst [vmem:[%s302 + $0x61] sm:$0xff] %v275
        %310 = vst [vmem:[%s302 + $0x71] sm:$0xff] %v276
        %311 = vst [vmem:[#allocation3] sm:$0xff] 0.0
        %312 = vst [vmem:[#allocation3 + $0x8] sm:$0xff] 0.0
        %313 = vst [vmem:[#allocation3 + $0x10] sm:$0xff] 0.0
        %314 = vst [vmem:[#allocation3 + $0x18] sm:$0xff] 0.0
        %315 = vst [vmem:[#allocation3 + $0x20] sm:$0xff] 0.0
        %316 = vst [vmem:[#allocation3 + $0x28] sm:$0xff] 0.0
        %317 = vst [vmem:[#allocation3 + $0x30] sm:$0xff] 0.0
        %318 = vst [vmem:[#allocation3 + $0x38] sm:$0xff] 0.0
        %v319 = vld [vmem:[#allocation2] sm:$0xff]
        %v320 = vld [vmem:[#allocation2 + $0x10] sm:$0xff]
        %v321 = vld [vmem:[#allocation2 + $0x20] sm:$0xff]
        %v322 = vld [vmem:[#allocation2 + $0x30] sm:$0xff]
        %v323 = vld [vmem:[#allocation2 + $0x40] sm:$0xff]
        %v324 = vld [vmem:[#allocation2 + $0x50] sm:$0xff]
        %v325 = vld [vmem:[#allocation2 + $0x60] sm:$0xff]
        %v326 = vld [vmem:[#allocation2 + $0x70] sm:$0xff]
        %v327 = vld [vmem:[#allocation3] sm:$0xff]
        %v328 = vld [vmem:[#allocation3 + $0x8] sm:$0xff]
        %v329 = vld [vmem:[#allocation3 + $0x10] sm:$0xff]
        %v330 = vld [vmem:[#allocation3 + $0x18] sm:$0xff]
        %v331 = vld [vmem:[#allocation3 + $0x20] sm:$0xff]
        %v332 = vld [vmem:[#allocation3 + $0x28] sm:$0xff]
        %v333 = vld [vmem:[#allocation3 + $0x30] sm:$0xff]
        %v334 = vld [vmem:[#allocation3 + $0x38] sm:$0xff]
        %v335 = vld [vmem:[#allocation7] sm:$0xff]
        %v336 = vld [vmem:[#allocation7 + $0x8] sm:$0xff]
        %v337 = vld [vmem:[#allocation7 + $0x10] sm:$0xff]
        %v338 = vld [vmem:[#allocation7 + $0x18] sm:$0xff]
        %v339 = vld [vmem:[#allocation7 + $0x20] sm:$0xff]
        %v340 = vld [vmem:[#allocation7 + $0x28] sm:$0xff]
        %v341 = vld [vmem:[#allocation7 + $0x30] sm:$0xff]
        %v342 = vld [vmem:[#allocation7 + $0x38] sm:$0xff]
        %v343 = vld [vmem:[#allocation7 + $0x40] sm:$0xff]
        %v344 = vld [vmem:[#allocation7 + $0x48] sm:$0xff]
        %v345 = vld [vmem:[#allocation7 + $0x50] sm:$0xff]
        %v346 = vld [vmem:[#allocation7 + $0x58] sm:$0xff]
        %v347 = vld [vmem:[#allocation7 + $0x60] sm:$0xff]
        %v348 = vld [vmem:[#allocation7 + $0x68] sm:$0xff]
        %v349 = vld [vmem:[#allocation7 + $0x70] sm:$0xff]
        %v350 = vld [vmem:[#allocation7 + $0x78] sm:$0xff]
        %351 = vmatpush.msra.mxu0 %v350
        %352 = vmatpush.msra.mxu0 %v349
        %353 = vmatpush.msra.mxu0 %v348
        %354 = vmatpush.msra.mxu0 %v347
        %355 = vmatpush.msra.mxu0 %v346
        %356 = vmatpush.msra.mxu0 %v345
        %357 = vmatpush.msra.mxu0 %v344
        %358 = vmatpush.msra.mxu0 %v343
        %359 = vmatpush.msra.mxu0 %v342
        %360 = vmatpush.msra.mxu0 %v341
        %361 = vmatpush.msra.mxu0 %v340
        %362 = vmatpush.msra.mxu0 %v339
        %363 = vmatpush.msra.mxu0 %v338
        %364 = vmatpush.msra.mxu0 %v337
        %365 = vmatpush.msra.mxu0 %v336
        %366 = vmatpush.msra.mxu0 %v335
        %367 = vmatmul.f32.gmra.mxu0 %v319
        %v368 = vpop.f32.mrf.mxu0
        %v369 = vadd.f32 0.0, %v368
        %370 = vmatmul.f32.gmra.mxu0 %v320
        %v371 = vpop.f32.mrf.mxu0
        %v372 = vadd.f32 0.0, %v371
        %373 = vmatmul.f32.gmra.mxu0 %v321
        %v374 = vpop.f32.mrf.mxu0
        %v375 = vadd.f32 0.0, %v374
        %376 = vmatmul.f32.gmra.mxu0 %v322
        %v377 = vpop.f32.mrf.mxu0
        %v378 = vadd.f32 0.0, %v377
        %379 = vmatmul.f32.gmra.mxu0 %v323
        %v380 = vpop.f32.mrf.mxu0
        %v381 = vadd.f32 0.0, %v380
        %382 = vmatmul.f32.gmra.mxu0 %v324
        %v383 = vpop.f32.mrf.mxu0
        %v384 = vadd.f32 0.0, %v383
        %385 = vmatmul.f32.gmra.mxu0 %v325
        %v386 = vpop.f32.mrf.mxu0
        %v387 = vadd.f32 0.0, %v386
        %388 = vmatmul.f32.gmra.mxu0 %v326
        %v389 = vpop.f32.mrf.mxu0
        %v390 = vadd.f32 0.0, %v389
        %391 = vdwg.mxu0
        %v392 = vadd.f32 %v327, %v369
        %v393 = vadd.f32 %v328, %v372
        %v394 = vadd.f32 %v329, %v375
        %v395 = vadd.f32 %v330, %v378
        %v396 = vadd.f32 %v331, %v381
        %v397 = vadd.f32 %v332, %v384
        %v398 = vadd.f32 %v333, %v387
        %v399 = vadd.f32 %v334, %v390
        %400 = vst [vmem:[#allocation3] sm:$0xff] %v392
        %401 = vst [vmem:[#allocation3 + $0x8] sm:$0xff] %v393
        %402 = vst [vmem:[#allocation3 + $0x10] sm:$0xff] %v394
        %403 = vst [vmem:[#allocation3 + $0x18] sm:$0xff] %v395
        %404 = vst [vmem:[#allocation3 + $0x20] sm:$0xff] %v396
        %405 = vst [vmem:[#allocation3 + $0x28] sm:$0xff] %v397
        %406 = vst [vmem:[#allocation3 + $0x30] sm:$0xff] %v398
        %407 = vst [vmem:[#allocation3 + $0x38] sm:$0xff] %v399
        %v408 = vld [vmem:[#allocation2 + $0x1] sm:$0xff]
        %v409 = vld [vmem:[#allocation2 + $0x11] sm:$0xff]
        %v410 = vld [vmem:[#allocation2 + $0x21] sm:$0xff]
        %v411 = vld [vmem:[#allocation2 + $0x31] sm:$0xff]
        %v412 = vld [vmem:[#allocation2 + $0x41] sm:$0xff]
        %v413 = vld [vmem:[#allocation2 + $0x51] sm:$0xff]
        %v414 = vld [vmem:[#allocation2 + $0x61] sm:$0xff]
        %v415 = vld [vmem:[#allocation2 + $0x71] sm:$0xff]
        %v416 = vld [vmem:[#allocation3] sm:$0xff]
        %v417 = vld [vmem:[#allocation3 + $0x8] sm:$0xff]
        %v418 = vld [vmem:[#allocation3 + $0x10] sm:$0xff]
        %v419 = vld [vmem:[#allocation3 + $0x18] sm:$0xff]
        %v420 = vld [vmem:[#allocation3 + $0x20] sm:$0xff]
        %v421 = vld [vmem:[#allocation3 + $0x28] sm:$0xff]
        %v422 = vld [vmem:[#allocation3 + $0x30] sm:$0xff]
        %v423 = vld [vmem:[#allocation3 + $0x38] sm:$0xff]
        %v424 = vld [vmem:[#allocation7 + $0x80] sm:$0xff]
        %v425 = vld [vmem:[#allocation7 + $0x88] sm:$0xff]
        %v426 = vld [vmem:[#allocation7 + $0x90] sm:$0xff]
        %v427 = vld [vmem:[#allocation7 + $0x98] sm:$0xff]
        %v428 = vld [vmem:[#allocation7 + $0xa0] sm:$0xff]
        %v429 = vld [vmem:[#allocation7 + $0xa8] sm:$0xff]
        %v430 = vld [vmem:[#allocation7 + $0xb0] sm:$0xff]
        %v431 = vld [vmem:[#allocation7 + $0xb8] sm:$0xff]
        %v432 = vld [vmem:[#allocation7 + $0xc0] sm:$0xff]
        %v433 = vld [vmem:[#allocation7 + $0xc8] sm:$0xff]
        %v434 = vld [vmem:[#allocation7 + $0xd0] sm:$0xff]
        %v435 = vld [vmem:[#allocation7 + $0xd8] sm:$0xff]
        %v436 = vld [vmem:[#allocation7 + $0xe0] sm:$0xff]
        %v437 = vld [vmem:[#allocation7 + $0xe8] sm:$0xff]
        %v438 = vld [vmem:[#allocation7 + $0xf0] sm:$0xff]
        %v439 = vld [vmem:[#allocation7 + $0xf8] sm:$0xff]
        %440 = vmatpush.msra.mxu0 %v439
        %441 = vmatpush.msra.mxu0 %v438
        %442 = vmatpush.msra.mxu0 %v437
        %443 = vmatpush.msra.mxu0 %v436
        %444 = vmatpush.msra.mxu0 %v435
        %445 = vmatpush.msra.mxu0 %v434
        %446 = vmatpush.msra.mxu0 %v433
        %447 = vmatpush.msra.mxu0 %v432
        %448 = vmatpush.msra.mxu0 %v431
        %449 = vmatpush.msra.mxu0 %v430
        %450 = vmatpush.msra.mxu0 %v429
        %451 = vmatpush.msra.mxu0 %v428
        %452 = vmatpush.msra.mxu0 %v427
        %453 = vmatpush.msra.mxu0 %v426
        %454 = vmatpush.msra.mxu0 %v425
        %455 = vmatpush.msra.mxu0 %v424
        %456 = vmatmul.f32.gmra.mxu0 %v408
        %v457 = vpop.f32.mrf.mxu0
        %v458 = vadd.f32 0.0, %v457
        %459 = vmatmul.f32.gmra.mxu0 %v409
        %v460 = vpop.f32.mrf.mxu0
        %v461 = vadd.f32 0.0, %v460
        %462 = vmatmul.f32.gmra.mxu0 %v410
        %v463 = vpop.f32.mrf.mxu0
        %v464 = vadd.f32 0.0, %v463
        %465 = vmatmul.f32.gmra.mxu0 %v411
        %v466 = vpop.f32.mrf.mxu0
        %v467 = vadd.f32 0.0, %v466
        %468 = vmatmul.f32.gmra.mxu0 %v412
        %v469 = vpop.f32.mrf.mxu0
        %v470 = vadd.f32 0.0, %v469
        %471 = vmatmul.f32.gmra.mxu0 %v413
        %v472 = vpop.f32.mrf.mxu0
        %v473 = vadd.f32 0.0, %v472
        %474 = vmatmul.f32.gmra.mxu0 %v414
        %v475 = vpop.f32.mrf.mxu0
        %v476 = vadd.f32 0.0, %v475
        %477 = vmatmul.f32.gmra.mxu0 %v415
        %v478 = vpop.f32.mrf.mxu0
        %v479 = vadd.f32 0.0, %v478
        %480 = vdwg.mxu0
        %v481 = vadd.f32 %v416, %v458
        %v482 = vadd.f32 %v417, %v461
        %v483 = vadd.f32 %v418, %v464
        %v484 = vadd.f32 %v419, %v467
        %v485 = vadd.f32 %v420, %v470
        %v486 = vadd.f32 %v421, %v473
        %v487 = vadd.f32 %v422, %v476
        %v488 = vadd.f32 %v423, %v479
        %489 = vst [vmem:[#allocation3] sm:$0xff] %v481
        %490 = vst [vmem:[#allocation3 + $0x8] sm:$0xff] %v482
        %491 = vst [vmem:[#allocation3 + $0x10] sm:$0xff] %v483
        %492 = vst [vmem:[#allocation3 + $0x18] sm:$0xff] %v484
        %493 = vst [vmem:[#allocation3 + $0x20] sm:$0xff] %v485
        %494 = vst [vmem:[#allocation3 + $0x28] sm:$0xff] %v486
        %495 = vst [vmem:[#allocation3 + $0x30] sm:$0xff] %v487
        %496 = vst [vmem:[#allocation3 + $0x38] sm:$0xff] %v488
        %v497 = vld [vmem:[#allocation2 + $0x2] sm:$0xff]
        %v498 = vld [vmem:[#allocation2 + $0x12] sm:$0xff]
        %v499 = vld [vmem:[#allocation2 + $0x22] sm:$0xff]
        %v500 = vld [vmem:[#allocation2 + $0x32] sm:$0xff]
        %v501 = vld [vmem:[#allocation2 + $0x42] sm:$0xff]
        %v502 = vld [vmem:[#allocation2 + $0x52] sm:$0xff]
        %v503 = vld [vmem:[#allocation2 + $0x62] sm:$0xff]
        %v504 = vld [vmem:[#allocation2 + $0x72] sm:$0xff]
        %v505 = vld [vmem:[#allocation3] sm:$0xff]
        %v506 = vld [vmem:[#allocation3 + $0x8] sm:$0xff]
        %v507 = vld [vmem:[#allocation3 + $0x10] sm:$0xff]
        %v508 = vld [vmem:[#allocation3 + $0x18] sm:$0xff]
        %v509 = vld [vmem:[#allocation3 + $0x20] sm:$0xff]
        %v510 = vld [vmem:[#allocation3 + $0x28] sm:$0xff]
        %v511 = vld [vmem:[#allocation3 + $0x30] sm:$0xff]
        %v512 = vld [vmem:[#allocation3 + $0x38] sm:$0xff]
        %v513 = vld [vmem:[#allocation7 + $0x100] sm:$0xff]
        %v514 = vld [vmem:[#allocation7 + $0x108] sm:$0xff]
        %v515 = vld [vmem:[#allocation7 + $0x110] sm:$0xff]
        %v516 = vld [vmem:[#allocation7 + $0x118] sm:$0xff]
        %v517 = vld [vmem:[#allocation7 + $0x120] sm:$0xff]
        %v518 = vld [vmem:[#allocation7 + $0x128] sm:$0xff]
        %v519 = vld [vmem:[#allocation7 + $0x130] sm:$0xff]
        %v520 = vld [vmem:[#allocation7 + $0x138] sm:$0xff]
        %v521 = vld [vmem:[#allocation7 + $0x140] sm:$0xff]
        %v522 = vld [vmem:[#allocation7 + $0x148] sm:$0xff]
        %v523 = vld [vmem:[#allocation7 + $0x150] sm:$0xff]
        %v524 = vld [vmem:[#allocation7 + $0x158] sm:$0xff]
        %v525 = vld [vmem:[#allocation7 + $0x160] sm:$0xff]
        %v526 = vld [vmem:[#allocation7 + $0x168] sm:$0xff]
        %v527 = vld [vmem:[#allocation7 + $0x170] sm:$0xff]
        %v528 = vld [vmem:[#allocation7 + $0x178] sm:$0xff]
        %529 = vmatpush.msra.mxu0 %v528
        %530 = vmatpush.msra.mxu0 %v527
        %531 = vmatpush.msra.mxu0 %v526
        %532 = vmatpush.msra.mxu0 %v525
        %533 = vmatpush.msra.mxu0 %v524
        %534 = vmatpush.msra.mxu0 %v523
        %535 = vmatpush.msra.mxu0 %v522
        %536 = vmatpush.msra.mxu0 %v521
        %537 = vmatpush.msra.mxu0 %v520
        %538 = vmatpush.msra.mxu0 %v519
        %539 = vmatpush.msra.mxu0 %v518
        %540 = vmatpush.msra.mxu0 %v517
        %541 = vmatpush.msra.mxu0 %v516
        %542 = vmatpush.msra.mxu0 %v515
        %543 = vmatpush.msra.mxu0 %v514
        %544 = vmatpush.msra.mxu0 %v513
        %545 = vmatmul.f32.gmra.mxu0 %v497
        %v546 = vpop.f32.mrf.mxu0
        %v547 = vadd.f32 0.0, %v546
        %548 = vmatmul.f32.gmra.mxu0 %v498
        %v549 = vpop.f32.mrf.mxu0
        %v550 = vadd.f32 0.0, %v549
        %551 = vmatmul.f32.gmra.mxu0 %v499
        %v552 = vpop.f32.mrf.mxu0
        %v553 = vadd.f32 0.0, %v552
        %554 = vmatmul.f32.gmra.mxu0 %v500
        %v555 = vpop.f32.mrf.mxu0
        %v556 = vadd.f32 0.0, %v555
        %557 = vmatmul.f32.gmra.mxu0 %v501
        %v558 = vpop.f32.mrf.mxu0
        %v559 = vadd.f32 0.0, %v558
        %560 = vmatmul.f32.gmra.mxu0 %v502
        %v561 = vpop.f32.mrf.mxu0
        %v562 = vadd.f32 0.0, %v561
        %563 = vmatmul.f32.gmra.mxu0 %v503
        %v564 = vpop.f32.mrf.mxu0
        %v565 = vadd.f32 0.0, %v564
        %566 = vmatmul.f32.gmra.mxu0 %v504
        %v567 = vpop.f32.mrf.mxu0
        %v568 = vadd.f32 0.0, %v567
        %569 = vdwg.mxu0
        %v570 = vadd.f32 %v505, %v547
        %v571 = vadd.f32 %v506, %v550
        %v572 = vadd.f32 %v507, %v553
        %v573 = vadd.f32 %v508, %v556
        %v574 = vadd.f32 %v509, %v559
        %v575 = vadd.f32 %v510, %v562
        %v576 = vadd.f32 %v511, %v565
        %v577 = vadd.f32 %v512, %v568
        %578 = vst [vmem:[#allocation3] sm:$0xff] %v570
        %579 = vst [vmem:[#allocation3 + $0x8] sm:$0xff] %v571
        %580 = vst [vmem:[#allocation3 + $0x10] sm:$0xff] %v572
        %581 = vst [vmem:[#allocation3 + $0x18] sm:$0xff] %v573
        %582 = vst [vmem:[#allocation3 + $0x20] sm:$0xff] %v574
        %583 = vst [vmem:[#allocation3 + $0x28] sm:$0xff] %v575
        %584 = vst [vmem:[#allocation3 + $0x30] sm:$0xff] %v576
        %585 = vst [vmem:[#allocation3 + $0x38] sm:$0xff] %v577
        %v586 = vld [vmem:[%s302] sm:$0xff]
        %v587 = vld [vmem:[%s302 + $0x10] sm:$0xff]
        %v588 = vld [vmem:[%s302 + $0x20] sm:$0xff]
        %v589 = vld [vmem:[%s302 + $0x30] sm:$0xff]
        %v590 = vld [vmem:[%s302 + $0x40] sm:$0xff]
        %v591 = vld [vmem:[%s302 + $0x50] sm:$0xff]
        %v592 = vld [vmem:[%s302 + $0x60] sm:$0xff]
        %v593 = vld [vmem:[%s302 + $0x70] sm:$0xff]
        %v594 = vld [vmem:[#allocation3] sm:$0xff]
        %v595 = vld [vmem:[#allocation3 + $0x8] sm:$0xff]
        %v596 = vld [vmem:[#allocation3 + $0x10] sm:$0xff]
        %v597 = vld [vmem:[#allocation3 + $0x18] sm:$0xff]
        %v598 = vld [vmem:[#allocation3 + $0x20] sm:$0xff]
        %v599 = vld [vmem:[#allocation3 + $0x28] sm:$0xff]
        %v600 = vld [vmem:[#allocation3 + $0x30] sm:$0xff]
        %v601 = vld [vmem:[#allocation3 + $0x38] sm:$0xff]
        %v602 = vld [vmem:[#allocation7 + $0x180] sm:$0xff]
        %v603 = vld [vmem:[#allocation7 + $0x188] sm:$0xff]
        %v604 = vld [vmem:[#allocation7 + $0x190] sm:$0xff]
        %v605 = vld [vmem:[#allocation7 + $0x198] sm:$0xff]
        %v606 = vld [vmem:[#allocation7 + $0x1a0] sm:$0xff]
        %v607 = vld [vmem:[#allocation7 + $0x1a8] sm:$0xff]
        %v608 = vld [vmem:[#allocation7 + $0x1b0] sm:$0xff]
        %v609 = vld [vmem:[#allocation7 + $0x1b8] sm:$0xff]
        %v610 = vld [vmem:[#allocation7 + $0x1c0] sm:$0xff]
        %v611 = vld [vmem:[#allocation7 + $0x1c8] sm:$0xff]
        %v612 = vld [vmem:[#allocation7 + $0x1d0] sm:$0xff]
        %v613 = vld [vmem:[#allocation7 + $0x1d8] sm:$0xff]
        %v614 = vld [vmem:[#allocation7 + $0x1e0] sm:$0xff]
        %v615 = vld [vmem:[#allocation7 + $0x1e8] sm:$0xff]
        %v616 = vld [vmem:[#allocation7 + $0x1f0] sm:$0xff]
        %v617 = vld [vmem:[#allocation7 + $0x1f8] sm:$0xff]
        %618 = vmatpush.msra.mxu0 %v617
        %619 = vmatpush.msra.mxu0 %v616
        %620 = vmatpush.msra.mxu0 %v615
        %621 = vmatpush.msra.mxu0 %v614
        %622 = vmatpush.msra.mxu0 %v613
        %623 = vmatpush.msra.mxu0 %v612
        %624 = vmatpush.msra.mxu0 %v611
        %625 = vmatpush.msra.mxu0 %v610
        %626 = vmatpush.msra.mxu0 %v609
        %627 = vmatpush.msra.mxu0 %v608
        %628 = vmatpush.msra.mxu0 %v607
        %629 = vmatpush.msra.mxu0 %v606
        %630 = vmatpush.msra.mxu0 %v605
        %631 = vmatpush.msra.mxu0 %v604
        %632 = vmatpush.msra.mxu0 %v603
        %633 = vmatpush.msra.mxu0 %v602
        %634 = vmatmul.f32.gmra.mxu0 %v586
        %v635 = vpop.f32.mrf.mxu0
        %v636 = vadd.f32 0.0, %v635
        %637 = vmatmul.f32.gmra.mxu0 %v587
        %v638 = vpop.f32.mrf.mxu0
        %v639 = vadd.f32 0.0, %v638
        %640 = vmatmul.f32.gmra.mxu0 %v588
        %v641 = vpop.f32.mrf.mxu0
        %v642 = vadd.f32 0.0, %v641
        %643 = vmatmul.f32.gmra.mxu0 %v589
        %v644 = vpop.f32.mrf.mxu0
        %v645 = vadd.f32 0.0, %v644
        %646 = vmatmul.f32.gmra.mxu0 %v590
        %v647 = vpop.f32.mrf.mxu0
        %v648 = vadd.f32 0.0, %v647
        %649 = vmatmul.f32.gmra.mxu0 %v591
        %v650 = vpop.f32.mrf.mxu0
        %v651 = vadd.f32 0.0, %v650
        %652 = vmatmul.f32.gmra.mxu0 %v592
        %v653 = vpop.f32.mrf.mxu0
        %v654 = vadd.f32 0.0, %v653
        %655 = vmatmul.f32.gmra.mxu0 %v593
        %v656 = vpop.f32.mrf.mxu0
        %v657 = vadd.f32 0.0, %v656
        %658 = vdwg.mxu0
        %v659 = vadd.f32 %v594, %v636
        %v660 = vadd.f32 %v595, %v639
        %v661 = vadd.f32 %v596, %v642
        %v662 = vadd.f32 %v597, %v645
        %v663 = vadd.f32 %v598, %v648
        %v664 = vadd.f32 %v599, %v651
        %v665 = vadd.f32 %v600, %v654
        %v666 = vadd.f32 %v601, %v657
        %667 = vst [vmem:[#allocation3] sm:$0xff] %v659
        %668 = vst [vmem:[#allocation3 + $0x8] sm:$0xff] %v660
        %669 = vst [vmem:[#allocation3 + $0x10] sm:$0xff] %v661
        %670 = vst [vmem:[#allocation3 + $0x18] sm:$0xff] %v662
        %671 = vst [vmem:[#allocation3 + $0x20] sm:$0xff] %v663
        %672 = vst [vmem:[#allocation3 + $0x28] sm:$0xff] %v664
        %673 = vst [vmem:[#allocation3 + $0x30] sm:$0xff] %v665
        %674 = vst [vmem:[#allocation3 + $0x38] sm:$0xff] %v666
        %v675 = vld [vmem:[%s302 + $0x1] sm:$0xff]
        %v676 = vld [vmem:[%s302 + $0x11] sm:$0xff]
        %v677 = vld [vmem:[%s302 + $0x21] sm:$0xff]
        %v678 = vld [vmem:[%s302 + $0x31] sm:$0xff]
        %v679 = vld [vmem:[%s302 + $0x41] sm:$0xff]
        %v680 = vld [vmem:[%s302 + $0x51] sm:$0xff]
        %v681 = vld [vmem:[%s302 + $0x61] sm:$0xff]
        %v682 = vld [vmem:[%s302 + $0x71] sm:$0xff]
        %v683 = vld [vmem:[#allocation3] sm:$0xff]
        %v684 = vld [vmem:[#allocation3 + $0x8] sm:$0xff]
        %v685 = vld [vmem:[#allocation3 + $0x10] sm:$0xff]
        %v686 = vld [vmem:[#allocation3 + $0x18] sm:$0xff]
        %v687 = vld [vmem:[#allocation3 + $0x20] sm:$0xff]
        %v688 = vld [vmem:[#allocation3 + $0x28] sm:$0xff]
        %v689 = vld [vmem:[#allocation3 + $0x30] sm:$0xff]
        %v690 = vld [vmem:[#allocation3 + $0x38] sm:$0xff]
        %v691 = vld [vmem:[#allocation7 + $0x200] sm:$0xff]
        %v692 = vld [vmem:[#allocation7 + $0x208] sm:$0xff]
        %v693 = vld [vmem:[#allocation7 + $0x210] sm:$0xff]
        %v694 = vld [vmem:[#allocation7 + $0x218] sm:$0xff]
        %v695 = vld [vmem:[#allocation7 + $0x220] sm:$0xff]
        %v696 = vld [vmem:[#allocation7 + $0x228] sm:$0xff]
        %v697 = vld [vmem:[#allocation7 + $0x230] sm:$0xff]
        %v698 = vld [vmem:[#allocation7 + $0x238] sm:$0xff]
        %v699 = vld [vmem:[#allocation7 + $0x240] sm:$0xff]
        %v700 = vld [vmem:[#allocation7 + $0x248] sm:$0xff]
        %v701 = vld [vmem:[#allocation7 + $0x250] sm:$0xff]
        %v702 = vld [vmem:[#allocation7 + $0x258] sm:$0xff]
        %v703 = vld [vmem:[#allocation7 + $0x260] sm:$0xff]
        %v704 = vld [vmem:[#allocation7 + $0x268] sm:$0xff]
        %v705 = vld [vmem:[#allocation7 + $0x270] sm:$0xff]
        %v706 = vld [vmem:[#allocation7 + $0x278] sm:$0xff]
        %707 = vmatpush.msra.mxu0 %v706
        %708 = vmatpush.msra.mxu0 %v705
        %709 = vmatpush.msra.mxu0 %v704
        %710 = vmatpush.msra.mxu0 %v703
        %711 = vmatpush.msra.mxu0 %v702
        %712 = vmatpush.msra.mxu0 %v701
        %713 = vmatpush.msra.mxu0 %v700
        %714 = vmatpush.msra.mxu0 %v699
        %715 = vmatpush.msra.mxu0 %v698
        %716 = vmatpush.msra.mxu0 %v697
        %717 = vmatpush.msra.mxu0 %v696
        %718 = vmatpush.msra.mxu0 %v695
        %719 = vmatpush.msra.mxu0 %v694
        %720 = vmatpush.msra.mxu0 %v693
        %721 = vmatpush.msra.mxu0 %v692
        %722 = vmatpush.msra.mxu0 %v691
        %723 = vmatmul.f32.gmra.mxu0 %v675
        %v724 = vpop.f32.mrf.mxu0
        %v725 = vadd.f32 0.0, %v724
        %726 = vmatmul.f32.gmra.mxu0 %v676
        %v727 = vpop.f32.mrf.mxu0
        %v728 = vadd.f32 0.0, %v727
        %729 = vmatmul.f32.gmra.mxu0 %v677
        %v730 = vpop.f32.mrf.mxu0
        %v731 = vadd.f32 0.0, %v730
        %732 = vmatmul.f32.gmra.mxu0 %v678
        %v733 = vpop.f32.mrf.mxu0
        %v734 = vadd.f32 0.0, %v733
        %735 = vmatmul.f32.gmra.mxu0 %v679
        %v736 = vpop.f32.mrf.mxu0
        %v737 = vadd.f32 0.0, %v736
        %738 = vmatmul.f32.gmra.mxu0 %v680
        %v739 = vpop.f32.mrf.mxu0
        %v740 = vadd.f32 0.0, %v739
        %741 = vmatmul.f32.gmra.mxu0 %v681
        %v742 = vpop.f32.mrf.mxu0
        %v743 = vadd.f32 0.0, %v742
        %744 = vmatmul.f32.gmra.mxu0 %v682
        %v745 = vpop.f32.mrf.mxu0
        %v746 = vadd.f32 0.0, %v745
        %747 = vdwg.mxu0
        %v748 = vadd.f32 %v683, %v725
        %v749 = vadd.f32 %v684, %v728
        %v750 = vadd.f32 %v685, %v731
        %v751 = vadd.f32 %v686, %v734
        %v752 = vadd.f32 %v687, %v737
        %v753 = vadd.f32 %v688, %v740
        %v754 = vadd.f32 %v689, %v743
        %v755 = vadd.f32 %v690, %v746
        %756 = vst [vmem:[#allocation3] sm:$0xff] %v748
        %757 = vst [vmem:[#allocation3 + $0x8] sm:$0xff] %v749
        %758 = vst [vmem:[#allocation3 + $0x10] sm:$0xff] %v750
        %759 = vst [vmem:[#allocation3 + $0x18] sm:$0xff] %v751
        %760 = vst [vmem:[#allocation3 + $0x20] sm:$0xff] %v752
        %761 = vst [vmem:[#allocation3 + $0x28] sm:$0xff] %v753
        %762 = vst [vmem:[#allocation3 + $0x30] sm:$0xff] %v754
        %763 = vst [vmem:[#allocation3 + $0x38] sm:$0xff] %v755
        %v764 = vld [vmem:[%s302 + $0x2] sm:$0xff]
        %v765 = vld [vmem:[%s302 + $0x12] sm:$0xff]
        %v766 = vld [vmem:[%s302 + $0x22] sm:$0xff]
        %v767 = vld [vmem:[%s302 + $0x32] sm:$0xff]
        %v768 = vld [vmem:[%s302 + $0x42] sm:$0xff]
        %v769 = vld [vmem:[%s302 + $0x52] sm:$0xff]
        %v770 = vld [vmem:[%s302 + $0x62] sm:$0xff]
        %v771 = vld [vmem:[%s302 + $0x72] sm:$0xff]
        %v772 = vld [vmem:[#allocation3] sm:$0xff]
        %v773 = vld [vmem:[#allocation3 + $0x8] sm:$0xff]
        %v774 = vld [vmem:[#allocation3 + $0x10] sm:$0xff]
        %v775 = vld [vmem:[#allocation3 + $0x18] sm:$0xff]
        %v776 = vld [vmem:[#allocation3 + $0x20] sm:$0xff]
        %v777 = vld [vmem:[#allocation3 + $0x28] sm:$0xff]
        %v778 = vld [vmem:[#allocation3 + $0x30] sm:$0xff]
        %v779 = vld [vmem:[#allocation3 + $0x38] sm:$0xff]
        %v780 = vld [vmem:[#allocation7 + $0x280] sm:$0xff]
        %v781 = vld [vmem:[#allocation7 + $0x288] sm:$0xff]
        %v782 = vld [vmem:[#allocation7 + $0x290] sm:$0xff]
        %v783 = vld [vmem:[#allocation7 + $0x298] sm:$0xff]
        %v784 = vld [vmem:[#allocation7 + $0x2a0] sm:$0xff]
        %v785 = vld [vmem:[#allocation7 + $0x2a8] sm:$0xff]
        %v786 = vld [vmem:[#allocation7 + $0x2b0] sm:$0xff]
        %v787 = vld [vmem:[#allocation7 + $0x2b8] sm:$0xff]
        %v788 = vld [vmem:[#allocation7 + $0x2c0] sm:$0xff]
        %v789 = vld [vmem:[#allocation7 + $0x2c8] sm:$0xff]
        %v790 = vld [vmem:[#allocation7 + $0x2d0] sm:$0xff]
        %v791 = vld [vmem:[#allocation7 + $0x2d8] sm:$0xff]
        %v792 = vld [vmem:[#allocation7 + $0x2e0] sm:$0xff]
        %v793 = vld [vmem:[#allocation7 + $0x2e8] sm:$0xff]
        %v794 = vld [vmem:[#allocation7 + $0x2f0] sm:$0xff]
        %v795 = vld [vmem:[#allocation7 + $0x2f8] sm:$0xff]
        %796 = vmatpush.msra.mxu0 %v795
        %797 = vmatpush.msra.mxu0 %v794
        %798 = vmatpush.msra.mxu0 %v793
        %799 = vmatpush.msra.mxu0 %v792
        %800 = vmatpush.msra.mxu0 %v791
        %801 = vmatpush.msra.mxu0 %v790
        %802 = vmatpush.msra.mxu0 %v789
        %803 = vmatpush.msra.mxu0 %v788
        %804 = vmatpush.msra.mxu0 %v787
        %805 = vmatpush.msra.mxu0 %v786
        %806 = vmatpush.msra.mxu0 %v785
        %807 = vmatpush.msra.mxu0 %v784
        %808 = vmatpush.msra.mxu0 %v783
        %809 = vmatpush.msra.mxu0 %v782
        %810 = vmatpush.msra.mxu0 %v781
        %811 = vmatpush.msra.mxu0 %v780
        %812 = vmatmul.f32.gmra.mxu0 %v764
        %v813 = vpop.f32.mrf.mxu0
        %v814 = vadd.f32 0.0, %v813
        %815 = vmatmul.f32.gmra.mxu0 %v765
        %v816 = vpop.f32.mrf.mxu0
        %v817 = vadd.f32 0.0, %v816
        %818 = vmatmul.f32.gmra.mxu0 %v766
        %v819 = vpop.f32.mrf.mxu0
        %v820 = vadd.f32 0.0, %v819
        %821 = vmatmul.f32.gmra.mxu0 %v767
        %v822 = vpop.f32.mrf.mxu0
        %v823 = vadd.f32 0.0, %v822
        %824 = vmatmul.f32.gmra.mxu0 %v768
        %v825 = vpop.f32.mrf.mxu0
        %v826 = vadd.f32 0.0, %v825
        %827 = vmatmul.f32.gmra.mxu0 %v769
        %v828 = vpop.f32.mrf.mxu0
        %v829 = vadd.f32 0.0, %v828
        %830 = vmatmul.f32.gmra.mxu0 %v770
        %v831 = vpop.f32.mrf.mxu0
        %v832 = vadd.f32 0.0, %v831
        %833 = vmatmul.f32.gmra.mxu0 %v771
        %v834 = vpop.f32.mrf.mxu0
        %v835 = vadd.f32 0.0, %v834
        %836 = vdwg.mxu0
        %v837 = vadd.f32 %v772, %v814
        %v838 = vadd.f32 %v773, %v817
        %v839 = vadd.f32 %v774, %v820
        %v840 = vadd.f32 %v775, %v823
        %v841 = vadd.f32 %v776, %v826
        %v842 = vadd.f32 %v777, %v829
        %v843 = vadd.f32 %v778, %v832
        %v844 = vadd.f32 %v779, %v835
        %845 = vst [vmem:[#allocation3] sm:$0xff] %v837
        %846 = vst [vmem:[#allocation3 + $0x8] sm:$0xff] %v838
        %847 = vst [vmem:[#allocation3 + $0x10] sm:$0xff] %v839
        %848 = vst [vmem:[#allocation3 + $0x18] sm:$0xff] %v840
        %849 = vst [vmem:[#allocation3 + $0x20] sm:$0xff] %v841
        %850 = vst [vmem:[#allocation3 + $0x28] sm:$0xff] %v842
        %851 = vst [vmem:[#allocation3 + $0x30] sm:$0xff] %v843
        %852 = vst [vmem:[#allocation3 + $0x38] sm:$0xff] %v844
        %s853 = scalar_lea.vmem [#allocation2], 32
        %v854 = vld [vmem:[%s853] sm:$0xff]
        %v855 = vld [vmem:[%s853 + $0x10] sm:$0xff]
        %v856 = vld [vmem:[%s853 + $0x20] sm:$0xff]
        %v857 = vld [vmem:[%s853 + $0x30] sm:$0xff]
        %v858 = vld [vmem:[%s853 + $0x40] sm:$0xff]
        %v859 = vld [vmem:[%s853 + $0x50] sm:$0xff]
        %v860 = vld [vmem:[%s853 + $0x60] sm:$0xff]
        %v861 = vld [vmem:[%s853 + $0x70] sm:$0xff]
        %v862 = vld [vmem:[#allocation3] sm:$0xff]
        %v863 = vld [vmem:[#allocation3 + $0x8] sm:$0xff]
        %v864 = vld [vmem:[#allocation3 + $0x10] sm:$0xff]
        %v865 = vld [vmem:[#allocation3 + $0x18] sm:$0xff]
        %v866 = vld [vmem:[#allocation3 + $0x20] sm:$0xff]
        %v867 = vld [vmem:[#allocation3 + $0x28] sm:$0xff]
        %v868 = vld [vmem:[#allocation3 + $0x30] sm:$0xff]
        %v869 = vld [vmem:[#allocation3 + $0x38] sm:$0xff]
        %v870 = vld [vmem:[#allocation7 + $0x300] sm:$0xff]
        %v871 = vld [vmem:[#allocation7 + $0x308] sm:$0xff]
        %v872 = vld [vmem:[#allocation7 + $0x310] sm:$0xff]
        %v873 = vld [vmem:[#allocation7 + $0x318] sm:$0xff]
        %v874 = vld [vmem:[#allocation7 + $0x320] sm:$0xff]
        %v875 = vld [vmem:[#allocation7 + $0x328] sm:$0xff]
        %v876 = vld [vmem:[#allocation7 + $0x330] sm:$0xff]
        %v877 = vld [vmem:[#allocation7 + $0x338] sm:$0xff]
        %v878 = vld [vmem:[#allocation7 + $0x340] sm:$0xff]
        %v879 = vld [vmem:[#allocation7 + $0x348] sm:$0xff]
        %v880 = vld [vmem:[#allocation7 + $0x350] sm:$0xff]
        %v881 = vld [vmem:[#allocation7 + $0x358] sm:$0xff]
        %v882 = vld [vmem:[#allocation7 + $0x360] sm:$0xff]
        %v883 = vld [vmem:[#allocation7 + $0x368] sm:$0xff]
        %v884 = vld [vmem:[#allocation7 + $0x370] sm:$0xff]
        %v885 = vld [vmem:[#allocation7 + $0x378] sm:$0xff]
        %886 = vmatpush.msra.mxu0 %v885
        %887 = vmatpush.msra.mxu0 %v884
        %888 = vmatpush.msra.mxu0 %v883
        %889 = vmatpush.msra.mxu0 %v882
        %890 = vmatpush.msra.mxu0 %v881
        %891 = vmatpush.msra.mxu0 %v880
        %892 = vmatpush.msra.mxu0 %v879
        %893 = vmatpush.msra.mxu0 %v878
        %894 = vmatpush.msra.mxu0 %v877
        %895 = vmatpush.msra.mxu0 %v876
        %896 = vmatpush.msra.mxu0 %v875
        %897 = vmatpush.msra.mxu0 %v874
        %898 = vmatpush.msra.mxu0 %v873
        %899 = vmatpush.msra.mxu0 %v872
        %900 = vmatpush.msra.mxu0 %v871
        %901 = vmatpush.msra.mxu0 %v870
        %902 = vmatmul.f32.gmra.mxu0 %v854
        %v903 = vpop.f32.mrf.mxu0
        %v904 = vadd.f32 0.0, %v903
        %905 = vmatmul.f32.gmra.mxu0 %v855
        %v906 = vpop.f32.mrf.mxu0
        %v907 = vadd.f32 0.0, %v906
        %908 = vmatmul.f32.gmra.mxu0 %v856
        %v909 = vpop.f32.mrf.mxu0
        %v910 = vadd.f32 0.0, %v909
        %911 = vmatmul.f32.gmra.mxu0 %v857
        %v912 = vpop.f32.mrf.mxu0
        %v913 = vadd.f32 0.0, %v912
        %914 = vmatmul.f32.gmra.mxu0 %v858
        %v915 = vpop.f32.mrf.mxu0
        %v916 = vadd.f32 0.0, %v915
        %917 = vmatmul.f32.gmra.mxu0 %v859
        %v918 = vpop.f32.mrf.mxu0
        %v919 = vadd.f32 0.0, %v918
        %920 = vmatmul.f32.gmra.mxu0 %v860
        %v921 = vpop.f32.mrf.mxu0
        %v922 = vadd.f32 0.0, %v921
        %923 = vmatmul.f32.gmra.mxu0 %v861
        %v924 = vpop.f32.mrf.mxu0
        %v925 = vadd.f32 0.0, %v924
        %926 = vdwg.mxu0
        %v927 = vadd.f32 %v862, %v904
        %v928 = vadd.f32 %v863, %v907
        %v929 = vadd.f32 %v864, %v910
        %v930 = vadd.f32 %v865, %v913
        %v931 = vadd.f32 %v866, %v916
        %v932 = vadd.f32 %v867, %v919
        %v933 = vadd.f32 %v868, %v922
        %v934 = vadd.f32 %v869, %v925
        %935 = vst [vmem:[#allocation3] sm:$0xff] %v927
        %936 = vst [vmem:[#allocation3 + $0x8] sm:$0xff] %v928
        %937 = vst [vmem:[#allocation3 + $0x10] sm:$0xff] %v929
        %938 = vst [vmem:[#allocation3 + $0x18] sm:$0xff] %v930
        %939 = vst [vmem:[#allocation3 + $0x20] sm:$0xff] %v931
        %940 = vst [vmem:[#allocation3 + $0x28] sm:$0xff] %v932
        %941 = vst [vmem:[#allocation3 + $0x30] sm:$0xff] %v933
        %942 = vst [vmem:[#allocation3 + $0x38] sm:$0xff] %v934
        %v943 = vld [vmem:[%s853 + $0x1] sm:$0xff]
        %v944 = vld [vmem:[%s853 + $0x11] sm:$0xff]
        %v945 = vld [vmem:[%s853 + $0x21] sm:$0xff]
        %v946 = vld [vmem:[%s853 + $0x31] sm:$0xff]
        %v947 = vld [vmem:[%s853 + $0x41] sm:$0xff]
        %v948 = vld [vmem:[%s853 + $0x51] sm:$0xff]
        %v949 = vld [vmem:[%s853 + $0x61] sm:$0xff]
        %v950 = vld [vmem:[%s853 + $0x71] sm:$0xff]
        %v951 = vld [vmem:[#allocation3] sm:$0xff]
        %v952 = vld [vmem:[#allocation3 + $0x8] sm:$0xff]
        %v953 = vld [vmem:[#allocation3 + $0x10] sm:$0xff]
        %v954 = vld [vmem:[#allocation3 + $0x18] sm:$0xff]
        %v955 = vld [vmem:[#allocation3 + $0x20] sm:$0xff]
        %v956 = vld [vmem:[#allocation3 + $0x28] sm:$0xff]
        %v957 = vld [vmem:[#allocation3 + $0x30] sm:$0xff]
        %v958 = vld [vmem:[#allocation3 + $0x38] sm:$0xff]
        %v959 = vld [vmem:[#allocation7 + $0x380] sm:$0xff]
        %v960 = vld [vmem:[#allocation7 + $0x388] sm:$0xff]
        %v961 = vld [vmem:[#allocation7 + $0x390] sm:$0xff]
        %v962 = vld [vmem:[#allocation7 + $0x398] sm:$0xff]
        %v963 = vld [vmem:[#allocation7 + $0x3a0] sm:$0xff]
        %v964 = vld [vmem:[#allocation7 + $0x3a8] sm:$0xff]
        %v965 = vld [vmem:[#allocation7 + $0x3b0] sm:$0xff]
        %v966 = vld [vmem:[#allocation7 + $0x3b8] sm:$0xff]
        %v967 = vld [vmem:[#allocation7 + $0x3c0] sm:$0xff]
        %v968 = vld [vmem:[#allocation7 + $0x3c8] sm:$0xff]
        %v969 = vld [vmem:[#allocation7 + $0x3d0] sm:$0xff]
        %v970 = vld [vmem:[#allocation7 + $0x3d8] sm:$0xff]
        %v971 = vld [vmem:[#allocation7 + $0x3e0] sm:$0xff]
        %v972 = vld [vmem:[#allocation7 + $0x3e8] sm:$0xff]
        %v973 = vld [vmem:[#allocation7 + $0x3f0] sm:$0xff]
        %v974 = vld [vmem:[#allocation7 + $0x3f8] sm:$0xff]
        %975 = vmatpush.msra.mxu0 %v974
        %976 = vmatpush.msra.mxu0 %v973
        %977 = vmatpush.msra.mxu0 %v972
        %978 = vmatpush.msra.mxu0 %v971
        %979 = vmatpush.msra.mxu0 %v970
        %980 = vmatpush.msra.mxu0 %v969
        %981 = vmatpush.msra.mxu0 %v968
        %982 = vmatpush.msra.mxu0 %v967
        %983 = vmatpush.msra.mxu0 %v966
        %984 = vmatpush.msra.mxu0 %v965
        %985 = vmatpush.msra.mxu0 %v964
        %986 = vmatpush.msra.mxu0 %v963
        %987 = vmatpush.msra.mxu0 %v962
        %988 = vmatpush.msra.mxu0 %v961
        %989 = vmatpush.msra.mxu0 %v960
        %990 = vmatpush.msra.mxu0 %v959
        %991 = vmatmul.f32.gmra.mxu0 %v943
        %v992 = vpop.f32.mrf.mxu0
        %v993 = vadd.f32 0.0, %v992
        %994 = vmatmul.f32.gmra.mxu0 %v944
        %v995 = vpop.f32.mrf.mxu0
        %v996 = vadd.f32 0.0, %v995
        %997 = vmatmul.f32.gmra.mxu0 %v945
        %v998 = vpop.f32.mrf.mxu0
        %v999 = vadd.f32 0.0, %v998
        %1000 = vmatmul.f32.gmra.mxu0 %v946
        %v1001 = vpop.f32.mrf.mxu0
        %v1002 = vadd.f32 0.0, %v1001
        %1003 = vmatmul.f32.gmra.mxu0 %v947
        %v1004 = vpop.f32.mrf.mxu0
        %v1005 = vadd.f32 0.0, %v1004
        %1006 = vmatmul.f32.gmra.mxu0 %v948
        %v1007 = vpop.f32.mrf.mxu0
        %v1008 = vadd.f32 0.0, %v1007
        %1009 = vmatmul.f32.gmra.mxu0 %v949
        %v1010 = vpop.f32.mrf.mxu0
        %v1011 = vadd.f32 0.0, %v1010
        %1012 = vmatmul.f32.gmra.mxu0 %v950
        %v1013 = vpop.f32.mrf.mxu0
        %v1014 = vadd.f32 0.0, %v1013
        %1015 = vdwg.mxu0
        %v1016 = vadd.f32 %v951, %v993
        %v1017 = vadd.f32 %v952, %v996
        %v1018 = vadd.f32 %v953, %v999
        %v1019 = vadd.f32 %v954, %v1002
        %v1020 = vadd.f32 %v955, %v1005
        %v1021 = vadd.f32 %v956, %v1008
        %v1022 = vadd.f32 %v957, %v1011
        %v1023 = vadd.f32 %v958, %v1014
        %1024 = vst [vmem:[#allocation3] sm:$0xff] %v1016
        %1025 = vst [vmem:[#allocation3 + $0x8] sm:$0xff] %v1017
        %1026 = vst [vmem:[#allocation3 + $0x10] sm:$0xff] %v1018
        %1027 = vst [vmem:[#allocation3 + $0x18] sm:$0xff] %v1019
        %1028 = vst [vmem:[#allocation3 + $0x20] sm:$0xff] %v1020
        %1029 = vst [vmem:[#allocation3 + $0x28] sm:$0xff] %v1021
        %1030 = vst [vmem:[#allocation3 + $0x30] sm:$0xff] %v1022
        %1031 = vst [vmem:[#allocation3 + $0x38] sm:$0xff] %v1023
        %v1032 = vld [vmem:[%s853 + $0x2] sm:$0xff]
        %v1033 = vld [vmem:[%s853 + $0x12] sm:$0xff]
        %v1034 = vld [vmem:[%s853 + $0x22] sm:$0xff]
        %v1035 = vld [vmem:[%s853 + $0x32] sm:$0xff]
        %v1036 = vld [vmem:[%s853 + $0x42] sm:$0xff]
        %v1037 = vld [vmem:[%s853 + $0x52] sm:$0xff]
        %v1038 = vld [vmem:[%s853 + $0x62] sm:$0xff]
        %v1039 = vld [vmem:[%s853 + $0x72] sm:$0xff]
        %v1040 = vld [vmem:[#allocation3] sm:$0xff]
        %v1041 = vld [vmem:[#allocation3 + $0x8] sm:$0xff]
        %v1042 = vld [vmem:[#allocation3 + $0x10] sm:$0xff]
        %v1043 = vld [vmem:[#allocation3 + $0x18] sm:$0xff]
        %v1044 = vld [vmem:[#allocation3 + $0x20] sm:$0xff]
        %v1045 = vld [vmem:[#allocation3 + $0x28] sm:$0xff]
        %v1046 = vld [vmem:[#allocation3 + $0x30] sm:$0xff]
        %v1047 = vld [vmem:[#allocation3 + $0x38] sm:$0xff]
        %v1048 = vld [vmem:[#allocation7 + $0x400] sm:$0xff]
        %v1049 = vld [vmem:[#allocation7 + $0x408] sm:$0xff]
        %v1050 = vld [vmem:[#allocation7 + $0x410] sm:$0xff]
        %v1051 = vld [vmem:[#allocation7 + $0x418] sm:$0xff]
        %v1052 = vld [vmem:[#allocation7 + $0x420] sm:$0xff]
        %v1053 = vld [vmem:[#allocation7 + $0x428] sm:$0xff]
        %v1054 = vld [vmem:[#allocation7 + $0x430] sm:$0xff]
        %v1055 = vld [vmem:[#allocation7 + $0x438] sm:$0xff]
        %v1056 = vld [vmem:[#allocation7 + $0x440] sm:$0xff]
        %v1057 = vld [vmem:[#allocation7 + $0x448] sm:$0xff]
        %v1058 = vld [vmem:[#allocation7 + $0x450] sm:$0xff]
        %v1059 = vld [vmem:[#allocation7 + $0x458] sm:$0xff]
        %v1060 = vld [vmem:[#allocation7 + $0x460] sm:$0xff]
        %v1061 = vld [vmem:[#allocation7 + $0x468] sm:$0xff]
        %v1062 = vld [vmem:[#allocation7 + $0x470] sm:$0xff]
        %v1063 = vld [vmem:[#allocation7 + $0x478] sm:$0xff]
        %1064 = vmatpush.msra.mxu0 %v1063
        %1065 = vmatpush.msra.mxu0 %v1062
        %1066 = vmatpush.msra.mxu0 %v1061
        %1067 = vmatpush.msra.mxu0 %v1060
        %1068 = vmatpush.msra.mxu0 %v1059
        %1069 = vmatpush.msra.mxu0 %v1058
        %1070 = vmatpush.msra.mxu0 %v1057
        %1071 = vmatpush.msra.mxu0 %v1056
        %1072 = vmatpush.msra.mxu0 %v1055
        %1073 = vmatpush.msra.mxu0 %v1054
        %1074 = vmatpush.msra.mxu0 %v1053
        %1075 = vmatpush.msra.mxu0 %v1052
        %1076 = vmatpush.msra.mxu0 %v1051
        %1077 = vmatpush.msra.mxu0 %v1050
        %1078 = vmatpush.msra.mxu0 %v1049
        %1079 = vmatpush.msra.mxu0 %v1048
        %1080 = vmatmul.f32.gmra.mxu0 %v1032
        %v1081 = vpop.f32.mrf.mxu0
        %v1082 = vadd.f32 0.0, %v1081
        %1083 = vmatmul.f32.gmra.mxu0 %v1033
        %v1084 = vpop.f32.mrf.mxu0
        %v1085 = vadd.f32 0.0, %v1084
        %1086 = vmatmul.f32.gmra.mxu0 %v1034
        %v1087 = vpop.f32.mrf.mxu0
        %v1088 = vadd.f32 0.0, %v1087
        %1089 = vmatmul.f32.gmra.mxu0 %v1035
        %v1090 = vpop.f32.mrf.mxu0
        %v1091 = vadd.f32 0.0, %v1090
        %1092 = vmatmul.f32.gmra.mxu0 %v1036
        %v1093 = vpop.f32.mrf.mxu0
        %v1094 = vadd.f32 0.0, %v1093
        %1095 = vmatmul.f32.gmra.mxu0 %v1037
        %v1096 = vpop.f32.mrf.mxu0
        %v1097 = vadd.f32 0.0, %v1096
        %1098 = vmatmul.f32.gmra.mxu0 %v1038
        %v1099 = vpop.f32.mrf.mxu0
        %v1100 = vadd.f32 0.0, %v1099
        %1101 = vmatmul.f32.gmra.mxu0 %v1039
        %v1102 = vpop.f32.mrf.mxu0
        %v1103 = vadd.f32 0.0, %v1102
        %1104 = vdwg.mxu0
        %v1105 = vadd.f32 %v1040, %v1082
        %v1106 = vadd.f32 %v1041, %v1085
        %v1107 = vadd.f32 %v1042, %v1088
        %v1108 = vadd.f32 %v1043, %v1091
        %v1109 = vadd.f32 %v1044, %v1094
        %v1110 = vadd.f32 %v1045, %v1097
        %v1111 = vadd.f32 %v1046, %v1100
        %v1112 = vadd.f32 %v1047, %v1103
        %1113 = vst [vmem:[#allocation3] sm:$0xff] %v1105
        %1114 = vst [vmem:[#allocation3 + $0x8] sm:$0xff] %v1106
        %1115 = vst [vmem:[#allocation3 + $0x10] sm:$0xff] %v1107
        %1116 = vst [vmem:[#allocation3 + $0x18] sm:$0xff] %v1108
        %1117 = vst [vmem:[#allocation3 + $0x20] sm:$0xff] %v1109
        %1118 = vst [vmem:[#allocation3 + $0x28] sm:$0xff] %v1110
        %1119 = vst [vmem:[#allocation3 + $0x30] sm:$0xff] %v1111
        %1120 = vst [vmem:[#allocation3 + $0x38] sm:$0xff] %v1112
        %v1121 = vld [vmem:[#allocation3] sm:$0xff]
        %v1122 = vld [vmem:[#allocation3 + $0x8] sm:$0xff]
        %v1123 = vld [vmem:[#allocation3 + $0x10] sm:$0xff]
        %v1124 = vld [vmem:[#allocation3 + $0x18] sm:$0xff]
        %v1125 = vld [vmem:[#allocation3 + $0x20] sm:$0xff]
        %v1126 = vld [vmem:[#allocation3 + $0x28] sm:$0xff]
        %v1127 = vld [vmem:[#allocation3 + $0x30] sm:$0xff]
        %v1128 = vld [vmem:[#allocation3 + $0x38] sm:$0xff]
        %1129 = vst [vmem:[%s212] sm:$0xff] %v1121
        %1130 = vst [vmem:[%s212 + $0x8] sm:$0xff] %v1122
        %1131 = vst [vmem:[%s212 + $0x10] sm:$0xff] %v1123
        %1132 = vst [vmem:[%s212 + $0x18] sm:$0xff] %v1124
        %1133 = vst [vmem:[%s212 + $0x20] sm:$0xff] %v1125
        %1134 = vst [vmem:[%s212 + $0x28] sm:$0xff] %v1126
        %1135 = vst [vmem:[%s212 + $0x30] sm:$0xff] %v1127
        %1136 = vst [vmem:[%s212 + $0x38] sm:$0xff] %v1128
        %v1137 = vadd.f32 %v1121, %v1122
        %v1138 = vadd.f32 %v1137, %v1123
        %v1139 = vadd.f32 %v1138, %v1124
        %v1140 = vadd.f32 %v1139, %v1125
        %v1141 = vadd.f32 %v1140, %v1126
        %v1142 = vadd.f32 %v1141, %v1127
        %v1143 = vadd.f32 %v1142, %v1128
        %v1144 = vrot.slane %v1143, 4
        %v1145 = vadd.f32 %v1143, %v1144
        %v1146 = vrot.slane %v1145, 2
        %v1147 = vadd.f32 %v1145, %v1146
        %v1148 = vrot.slane %v1147, 1
        %v1149 = vadd.f32 %v1147, %v1148
        %1150 = vst [vmem:[%s219] sm:$0x1] %v1149
        %v1151 = vmul.f32 %v1121, %v1121
        %v1152 = vmul.f32 %v1122, %v1122
        %v1153 = vmul.f32 %v1123, %v1123
        %v1154 = vmul.f32 %v1124, %v1124
        %v1155 = vmul.f32 %v1125, %v1125
        %v1156 = vmul.f32 %v1126, %v1126
        %v1157 = vmul.f32 %v1127, %v1127
        %v1158 = vmul.f32 %v1128, %v1128
        %v1159 = vadd.f32 %v1151, %v1152
        %v1160 = vadd.f32 %v1159, %v1153
        %v1161 = vadd.f32 %v1160, %v1154
        %v1162 = vadd.f32 %v1161, %v1155
        %v1163 = vadd.f32 %v1162, %v1156
        %v1164 = vadd.f32 %v1163, %v1157
        %v1165 = vadd.f32 %v1164, %v1158
        %v1166 = vrot.slane %v1165, 4
        %v1167 = vadd.f32 %v1165, %v1166
        %v1168 = vrot.slane %v1167, 2
        %v1169 = vadd.f32 %v1167, %v1168
        %v1170 = vrot.slane %v1169, 1
        %v1171 = vadd.f32 %v1169, %v1170
        %1172 = vst [vmem:[%s219 + $0x1] sm:$0x1] %v1171
        %s1173 = sand.u32 %s80, 1
        %s1174 = scalar_lea.sflag [#allocation6], %s1173
        %s1175 = sand.u32 %s80, 1
        %s1176 = smul.addr %s1175, 64
        %s1177 = scalar_lea.vmem [#allocation9], %s1176
        %s1178 = sand.u32 %s106, 1
        %s1179 = scalar_lea.sflag [#allocation11], %s1178
        %s1180 = sand.u32 %s106, 1
        %s1181 = smul.addr %s1180, 2
        %s1182 = scalar_lea.vmem [#allocation10], %s1181
        // Predicated region
        $region37: #{tpu_custom_call.1} parent=27 // pred_check
          %p1183 = pneg %p90
        $region38: #{tpu_custom_call.1} parent=27 // pred_check_branch
          %1185 = sbr.rel (%p1183) target = $region40
        $region39: #{tpu_custom_call.1} parent=27 // pred_region
          %1187 = vsyncadd %s1174, 0
          %s1188 = smul.addr %s25, 8
          %s1189 = smul.addr %s1188, 8
          %s1190 = scalar_lea.hbm %s2, %s1189
          %s1191 = sshll.u32 %s1177, 4
          %s1192 = int_to_ptr.vmem [resolvable:$true] %s1191
          %s1193 = sshll.u32 %s1190, 4
          %s1194 = int_to_ptr.hbm [resolvable:$true] %s1193
          %1199 = dma.vmem_to_hbm [thread:$0]  %s1192, 1024, %s1194, %s1174, 128, 128, 8
        $region40: #{tpu_custom_call.1} parent=27 // pred_fallthru
          _
        // Predicated region
        $region41: #{tpu_custom_call.1} parent=27 // pred_check
          %p1200 = pneg %p116
        $region42: #{tpu_custom_call.1} parent=27 // pred_check_branch
          %1202 = sbr.rel (%p1200) target = $region44
        $region43: #{tpu_custom_call.1} parent=27 // pred_region
          %1204 = vsyncadd %s1179, 0
          %s1205 = smul.addr %s25, 2
          %s1206 = scalar_lea.hbm %s3, %s1205
          %s1208 = sshll.u32 %s1182, 4
          %s1209 = int_to_ptr.vmem [resolvable:$true] %s1208
          %s1210 = sshll.u32 %s1206, 4
          %s1211 = int_to_ptr.hbm [resolvable:$true] %s1210
          %1213 = dma.vmem_to_hbm [thread:$0]  %s1209, 32, %s1211, %s1179
        $region44: #{tpu_custom_call.1} parent=27 // pred_fallthru
          _
      $region28: #{tpu_custom_call.1} parent=5 // pred_fallthru
        _
      %p1214 = scmp.le.s32.totalorder 2, %s20
      // Predicated region
      $region45: #{tpu_custom_call.1} parent=5 // pred_check
        %p1215 = pneg %p1214
      $region46: #{tpu_custom_call.1} parent=5 // pred_check_branch
        %1217 = sbr.rel (%p1215) target = $region48
      $region47: #{tpu_custom_call.1} parent=5 // pred_region
        %s1218 = ssub.s32 %s20, 2
        // Predicated region
        $region49: #{tpu_custom_call.1} parent=47 // pred_check
          %p1219 = pneg %p96
        $region50: #{tpu_custom_call.1} parent=47 // pred_check_branch
          %1221 = sbr.rel (%p1219) target = $region52
        $region51: #{tpu_custom_call.1} parent=47 // pred_region
          %s1222 = sand.u32 %s81, 1
          %s1223 = scalar_lea.sflag [#allocation6], %s1222
          %s1224 = sand.u32 %s81, 1
          %s1225 = smul.addr %s1224, 64
          %s1226 = scalar_lea.vmem [#allocation9], %s1225
          %1228 = dma.done %s1223, 1024
        $region52: #{tpu_custom_call.1} parent=47 // pred_fallthru
          _
        // Predicated region
        $region53: #{tpu_custom_call.1} parent=47 // pred_check
          %p1229 = pneg %p122
        $region54: #{tpu_custom_call.1} parent=47 // pred_check_branch
          %1231 = sbr.rel (%p1229) target = $region56
        $region55: #{tpu_custom_call.1} parent=47 // pred_region
          %s1232 = sand.u32 %s107, 1
          %s1233 = scalar_lea.sflag [#allocation11], %s1232
          %s1234 = sand.u32 %s107, 1
          %s1235 = smul.addr %s1234, 2
          %s1236 = scalar_lea.vmem [#allocation10], %s1235
          %1238 = dma.done %s1233, 32
        $region56: #{tpu_custom_call.1} parent=47 // pred_fallthru
          _
      $region48: #{tpu_custom_call.1} parent=5 // pred_fallthru
        _
    $region6: #{tpu_custom_call.1} parent=1 // loop_footer
      %s24 = sadd.s32 1, %s20
    $region7: #{tpu_custom_call.1} parent=1 // loop_footer_branch
      %19 = sbr.rel target = $region3
    $region8: #{tpu_custom_call.1} parent=1 // loop_exit
      _
    %1239 = vsyncpa [#allocation5], 1
    %s1240 = scalar_lea.sflag [#allocation5], 1
    %1241 = vsyncpa %s1240, 1
    %1242 = vsyncpa [#allocation8], 1
    %1243 = vsyncpa [#allocation6], 1
    %s1244 = scalar_lea.sflag [#allocation6], 1
    %1245 = vsyncpa %s1244, 1
    %1246 = vsyncpa [#allocation11], 1
    %s1247 = scalar_lea.sflag [#allocation11], 1
    %1248 = vsyncpa %s1247, 1

</llo_original>
